<compile_context>
chip_gen: v5e
topology: v5e:2x2
jax: 0.10.0
libtpu: 0.0.40
codegen_flags: <defaults>
</compile_context>

<pallas_src>
import jax
import jax.numpy as jnp
from jax import lax
from jax.experimental import pallas as pl
from jax.experimental.pallas import tpu as pltpu

# Small-shape stand-ins for the module constants (real: seq_len=30, emb_dim=40, totalSyscalls=456)
SEQ_LEN = 8
EMB_DIM = 32
TOTAL_SYSCALLS = 63
INPUT_DIM = TOTAL_SYSCALLS + 1          # 64

LANE = 128


def _pad_up(n, m=LANE):
    return ((n + m - 1) // m) * m


I_PAD = _pad_up(INPUT_DIM)              # encoder input feature dim, padded
E_PAD = _pad_up(EMB_DIM)                # encoder hidden / decoder input dim, padded
D_PAD = _pad_up(INPUT_DIM)              # decoder hidden dim, padded


def _aiav_kernel(x_ref, ewih_ref, ewhh_ref, eb_ref, db_ref,
                 dwih_hbm, dwhh_hbm,                       # HBM (pl.ANY) inputs
                 out_ref,
                 xproj_s, dwih_s, dwhh_s, dma_sem):        # scratch
    """Fused encoder->decoder LSTM forward."""
    T = x_ref.shape[0]
    E = ewhh_ref.shape[0]               # padded encoder hidden size
    D = dwhh_s.shape[0]                 # padded decoder hidden size

    # Kick off decoder-weight DMAs; they land while the encoder recurrence runs.
    cp_wih = pltpu.make_async_copy(dwih_hbm, dwih_s, dma_sem.at[0])
    cp_whh = pltpu.make_async_copy(dwhh_hbm, dwhh_s, dma_sem.at[1])
    cp_wih.start()
    cp_whh.start()

    # ---------------- encoder ----------------
    # Hoisted input projection: one (T, I) x (I, 4E) matmul + bias, into VMEM scratch.
    xproj_s[...] = (jnp.dot(x_ref[...].astype(jnp.bfloat16), ewih_ref[...],
                            preferred_element_type=jnp.float32)
                    + eb_ref[...])                                     # (T, 4E) f32

    def enc_step(t, carry):
        h, c = carry
        gates = xproj_s[pl.ds(t, 1), :] + jnp.dot(
            h.astype(jnp.bfloat16), ewhh_ref[...],
            preferred_element_type=jnp.float32)
        i = jax.nn.sigmoid(gates[:, 0 * E:1 * E])
        f = jax.nn.sigmoid(gates[:, 1 * E:2 * E])
        g = jnp.tanh(gates[:, 2 * E:3 * E])
        o = jax.nn.sigmoid(gates[:, 3 * E:4 * E])
        c = f * c + i * g
        h = o * jnp.tanh(c)
        return h, c

    h0 = jnp.zeros((1, E), jnp.float32)
    c0 = jnp.zeros((1, E), jnp.float32)
    h, _ = lax.fori_loop(0, T, enc_step, (h0, c0))
    # h is the final encoder hidden state (1, E), still on-chip.

    # ---------------- decoder ----------------
    # Decoder weights must be resident now.
    cp_wih.wait()
    cp_whh.wait()

    # Decoder input is the same (1, E) vector at every step -> project exactly once.
    din = (jnp.dot(h.astype(jnp.bfloat16), dwih_s[...],
                   preferred_element_type=jnp.float32)
           + db_ref[...])                                              # (1, 4D) f32

    def dec_step(t, carry):
        hd, cd = carry
        gates = din + jnp.dot(hd.astype(jnp.bfloat16), dwhh_s[...],
                              preferred_element_type=jnp.float32)
        i = jax.nn.sigmoid(gates[:, 0 * D:1 * D])
        f = jax.nn.sigmoid(gates[:, 1 * D:2 * D])
        g = jnp.tanh(gates[:, 2 * D:3 * D])
        o = jax.nn.sigmoid(gates[:, 3 * D:4 * D])
        cd = f * cd + i * g
        hd = o * jnp.tanh(cd)
        out_ref[pl.ds(t, 1), :] = hd            # lane-dense per-step row store
        return hd, cd

    hd0 = jnp.zeros((1, D), jnp.float32)
    cd0 = jnp.zeros((1, D), jnp.float32)
    lax.fori_loop(0, T, dec_step, (hd0, cd0))


def _pad_gate_weights(w, in_dim, hid, in_pad, hid_pad):
    """(in_dim, 4*hid) -> (in_pad, 4*hid_pad); pad each gate's H block separately."""
    w4 = w.reshape(in_dim, 4, hid)
    w4 = jnp.pad(w4, ((0, in_pad - in_dim), (0, 0), (0, hid_pad - hid)))
    return w4.reshape(in_pad, 4 * hid_pad)


def _pad_gate_bias(b, hid, hid_pad):
    b4 = b.reshape(1, 4, hid)
    b4 = jnp.pad(b4, ((0, 0), (0, 0), (0, hid_pad - hid)))
    return b4.reshape(1, 4 * hid_pad)


@jax.jit
def aiav_forward(x, params):
    # encoder.encode: x.reshape((1, seq_len, inp)) with batch=1 -> keep (seq_len, inp)
    x = x.reshape(SEQ_LEN, INPUT_DIM)
    xp = jnp.pad(x, ((0, 0), (0, I_PAD - INPUT_DIM)))

    bf16 = jnp.bfloat16
    ewih = _pad_gate_weights(params["enc_wih"], INPUT_DIM, EMB_DIM, I_PAD, E_PAD).astype(bf16)
    ewhh = _pad_gate_weights(params["enc_whh"], EMB_DIM, EMB_DIM, E_PAD, E_PAD).astype(bf16)
    eb = _pad_gate_bias(params["enc_b"], EMB_DIM, E_PAD)
    dwih = _pad_gate_weights(params["dec_wih"], EMB_DIM, INPUT_DIM, E_PAD, D_PAD).astype(bf16)
    dwhh = _pad_gate_weights(params["dec_whh"], INPUT_DIM, INPUT_DIM, D_PAD, D_PAD).astype(bf16)
    db = _pad_gate_bias(params["dec_b"], INPUT_DIM, D_PAD)

    vmem = pl.BlockSpec(memory_space=pltpu.MemorySpace.VMEM)
    anyspace = pl.BlockSpec(memory_space=pl.ANY)

    out_pad = pl.pallas_call(
        _aiav_kernel,
        out_shape=jax.ShapeDtypeStruct((SEQ_LEN, D_PAD), jnp.float32),
        in_specs=[vmem, vmem, vmem, vmem, vmem,   # x, ewih, ewhh, eb, db
                  anyspace, anyspace],            # dwih, dwhh stay in HBM, DMA'd manually
        out_specs=vmem,
        scratch_shapes=[
            pltpu.VMEM((SEQ_LEN, 4 * E_PAD), jnp.float32),   # xproj
            pltpu.VMEM((E_PAD, 4 * D_PAD), jnp.bfloat16),    # dwih landing buffer
            pltpu.VMEM((D_PAD, 4 * D_PAD), jnp.bfloat16),    # dwhh landing buffer
            pltpu.SemaphoreType.DMA((2,)),
        ],
        compiler_params=pltpu.CompilerParams(
            vmem_limit_bytes=32 * 1024 * 1024),
    )(xp, ewih, ewhh, eb, db, dwih, dwhh)

    return out_pad[:, :INPUT_DIM]                 # (SEQ_LEN, totalSyscalls+1)


def init_params(key):
    """Deterministic PyTorch-style uniform(-1/sqrt(H), 1/sqrt(H)) init (unpadded shapes)."""
    ks = jax.random.split(key, 6)

    def u(k, shape, h):
        bound = 1.0 / jnp.sqrt(jnp.float32(h))
        return jax.random.uniform(k, shape, jnp.float32, -bound, bound)

    return {
        # encoder: input INPUT_DIM -> hidden EMB_DIM
        "enc_wih": u(ks[0], (INPUT_DIM, 4 * EMB_DIM), EMB_DIM),
        "enc_whh": u(ks[1], (EMB_DIM, 4 * EMB_DIM), EMB_DIM),
        "enc_b":   u(ks[2], (1, 4 * EMB_DIM), EMB_DIM),
        # decoder: input EMB_DIM -> hidden INPUT_DIM
        "dec_wih": u(ks[3], (EMB_DIM, 4 * INPUT_DIM), INPUT_DIM),
        "dec_whh": u(ks[4], (INPUT_DIM, 4 * INPUT_DIM), INPUT_DIM),
        "dec_b":   u(ks[5], (1, 4 * INPUT_DIM), INPUT_DIM),
    }


# ---------- pure-JAX f32 reference (for correctness check only) ----------
def _lstm_ref(x, w_ih, w_hh, b, H):
    def step(carry, x_t):
        h, c = carry
        gates = x_t @ w_ih + h @ w_hh + b[0]
        i = jax.nn.sigmoid(gates[0 * H:1 * H])
        f = jax.nn.sigmoid(gates[1 * H:2 * H])
        g = jnp.tanh(gates[2 * H:3 * H])
        o = jax.nn.sigmoid(gates[3 * H:4 * H])
        c = f * c + i * g
        h = o * jnp.tanh(c)
        return (h, c), h
    (h, c), hs = lax.scan(step, (jnp.zeros(H), jnp.zeros(H)), x)
    return hs


def aiav_ref(x, params):
    x = x.reshape(SEQ_LEN, INPUT_DIM)
    enc_hs = _lstm_ref(x, params["enc_wih"], params["enc_whh"], params["enc_b"], EMB_DIM)
    hidden = enc_hs[-1]
    dec_in = jnp.tile(hidden[None, :], (SEQ_LEN, 1))
    return _lstm_ref(dec_in, params["dec_wih"], params["dec_whh"], params["dec_b"], INPUT_DIM)


if __name__ == "__main__":
    key = jax.random.PRNGKey(0)
    k_x, k_p = jax.random.split(key)
    x = jax.random.normal(k_x, (SEQ_LEN, INPUT_DIM), jnp.float32)
    params = init_params(k_p)

    out = aiav_forward(x, params)
    jax.block_until_ready(out)

    ref = aiav_ref(x, params)
    assert out.shape == (SEQ_LEN, INPUT_DIM)
    # bf16 matmul weights -> loosened tolerance vs. the f32 reference (per review note)
    assert jnp.allclose(out, ref, atol=3e-2, rtol=3e-2), "mismatch vs reference"

    print("KERNEL_OK")
</pallas_src>

<mosaic_0001>
module attributes {stable_mosaic.version = 11 : i64} {
  func.func @_aiav_kernel(%arg0: memref<8x128xf32, #tpu.memory_space<vmem>>, %arg1: memref<128x512xbf16, #tpu.memory_space<vmem>>, %arg2: memref<128x512xbf16, #tpu.memory_space<vmem>>, %arg3: memref<1x512xf32, #tpu.memory_space<vmem>>, %arg4: memref<1x512xf32, #tpu.memory_space<vmem>>, %arg5: memref<128x512xbf16, #tpu.memory_space<any>>, %arg6: memref<128x512xbf16, #tpu.memory_space<any>>, %arg7: memref<8x128xf32, #tpu.memory_space<vmem>>, %arg8: memref<8x512xf32, #tpu.memory_space<vmem>>, %arg9: memref<128x512xbf16, #tpu.memory_space<vmem>>, %arg10: memref<128x512xbf16, #tpu.memory_space<vmem>>, %arg11: memref<2x!tpu.dma_semaphore, #tpu.memory_space<semaphore_mem>>) attributes {dimension_semantics = [], scalar_prefetch = 0 : i64, scratch_operands = 4 : i64, tpu.core_type = #tpu.core_type<tc>} {
    %c0_i32 = arith.constant 0 : i32
    %0 = tpu.memref_slice %arg11[%c0_i32] : memref<2x!tpu.dma_semaphore, #tpu.memory_space<semaphore_mem>> -> memref<1x!tpu.dma_semaphore, #tpu.memory_space<semaphore_mem>>
    %1 = tpu.memref_squeeze %0 : memref<1x!tpu.dma_semaphore, #tpu.memory_space<semaphore_mem>> -> memref<!tpu.dma_semaphore, #tpu.memory_space<semaphore_mem>>
    tpu.enqueue_dma source(%arg5 : memref<128x512xbf16, #tpu.memory_space<any>>) target(%arg9 : memref<128x512xbf16, #tpu.memory_space<vmem>>) target_semaphore(%1 : memref<!tpu.dma_semaphore, #tpu.memory_space<semaphore_mem>>)
    %c1_i32 = arith.constant 1 : i32
    %2 = tpu.memref_slice %arg11[%c1_i32] : memref<2x!tpu.dma_semaphore, #tpu.memory_space<semaphore_mem>> -> memref<1x!tpu.dma_semaphore, #tpu.memory_space<semaphore_mem>>
    %3 = tpu.memref_squeeze %2 : memref<1x!tpu.dma_semaphore, #tpu.memory_space<semaphore_mem>> -> memref<!tpu.dma_semaphore, #tpu.memory_space<semaphore_mem>>
    tpu.enqueue_dma source(%arg6 : memref<128x512xbf16, #tpu.memory_space<any>>) target(%arg10 : memref<128x512xbf16, #tpu.memory_space<vmem>>) target_semaphore(%3 : memref<!tpu.dma_semaphore, #tpu.memory_space<semaphore_mem>>)
    %c0 = arith.constant 0 : index
    %c0_0 = arith.constant 0 : index
    %4 = vector.load %arg0[%c0, %c0_0] : memref<8x128xf32, #tpu.memory_space<vmem>>, vector<8x128xf32>
    %5 = arith.truncf %4 : vector<8x128xf32> to vector<8x128xbf16>
    %c0_1 = arith.constant 0 : index
    %c0_2 = arith.constant 0 : index
    %6 = vector.load %arg1[%c0_1, %c0_2] : memref<128x512xbf16, #tpu.memory_space<vmem>>, vector<128x512xbf16>
    %cst = arith.constant dense<0.000000e+00> : vector<8x512xf32>
    %7 = tpu.matmul %5, %6, %cst {dimension_numbers = #tpu.dot_dimension_numbers<[1], [0], [0], [1], [0, 0, 1, 1], [], []>} : vector<8x128xbf16>, vector<128x512xbf16>, vector<8x512xf32> -> vector<8x512xf32>
    %c0_3 = arith.constant 0 : index
    %c0_4 = arith.constant 0 : index
    %8 = vector.load %arg3[%c0_3, %c0_4] : memref<1x512xf32, #tpu.memory_space<vmem>>, vector<1x512xf32>
    %9 = vector.broadcast %8 : vector<1x512xf32> to vector<8x512xf32>
    %10 = arith.addf %7, %9 : vector<8x512xf32>
    %c0_5 = arith.constant 0 : index
    %c0_6 = arith.constant 0 : index
    %11 = vector.load %arg8[%c0_5, %c0_6] : memref<8x512xf32, #tpu.memory_space<vmem>>, vector<8x512xf32>
    tpu.vector_store %arg8[%c0_5, %c0_6], %10 {strides = array<i32>} : memref<8x512xf32, #tpu.memory_space<vmem>>, vector<8x512xf32>,
    %cst_7 = arith.constant 0.000000e+00 : f32
    %12 = vector.broadcast %cst_7 : f32 to vector<1x128xf32>
    %cst_8 = arith.constant 0.000000e+00 : f32
    %13 = vector.broadcast %cst_8 : f32 to vector<1x128xf32>
    %c0_i32_9 = arith.constant 0 : i32
    %c8_i32 = arith.constant 8 : i32
    %14 = arith.addi %c0_i32_9, %c8_i32 : i32
    %c1_i32_10 = arith.constant 1 : i32
    %15:2 = scf.for %arg12 = %c0_i32_9 to %14 step %c1_i32_10 iter_args(%arg13 = %12, %arg14 = %13) -> (vector<1x128xf32>, vector<1x128xf32>)  : i32 {
      %29 = arith.index_cast %arg12 : i32 to index
      %c0_25 = arith.constant 0 : index
      %30 = vector.load %arg8[%29, %c0_25] : memref<8x512xf32, #tpu.memory_space<vmem>>, vector<1x512xf32>
      %31 = arith.truncf %arg13 : vector<1x128xf32> to vector<1x128xbf16>
      %c0_26 = arith.constant 0 : index
      %c0_27 = arith.constant 0 : index
      %32 = vector.load %arg2[%c0_26, %c0_27] : memref<128x512xbf16, #tpu.memory_space<vmem>>, vector<128x512xbf16>
      %cst_28 = arith.constant dense<0.000000e+00> : vector<1x512xf32>
      %33 = tpu.matmul %31, %32, %cst_28 {dimension_numbers = #tpu.dot_dimension_numbers<[1], [0], [0], [1], [0, 0, 1, 1], [], []>} : vector<1x128xbf16>, vector<128x512xbf16>, vector<1x512xf32> -> vector<1x512xf32>
      %34 = arith.addf %30, %33 : vector<1x512xf32>
      %35 = vector.extract_strided_slice %34 {offsets = [0, 0], sizes = [1, 128], strides = [1, 1]} : vector<1x512xf32> to vector<1x128xf32>
      %36 = arith.negf %35 : vector<1x128xf32>
      %37 = math.exp %36 : vector<1x128xf32>
      %cst_29 = arith.constant 1.000000e+00 : f32
      %38 = vector.broadcast %cst_29 : f32 to vector<1x128xf32>
      %39 = arith.addf %38, %37 : vector<1x128xf32>
      %40 = arith.divf %38, %39 : vector<1x128xf32>
      %41 = vector.extract_strided_slice %34 {offsets = [0, 128], sizes = [1, 128], strides = [1, 1]} : vector<1x512xf32> to vector<1x128xf32>
      %42 = arith.negf %41 : vector<1x128xf32>
      %43 = math.exp %42 : vector<1x128xf32>
      %cst_30 = arith.constant 1.000000e+00 : f32
      %44 = vector.broadcast %cst_30 : f32 to vector<1x128xf32>
      %45 = arith.addf %44, %43 : vector<1x128xf32>
      %46 = arith.divf %44, %45 : vector<1x128xf32>
      %47 = vector.extract_strided_slice %34 {offsets = [0, 256], sizes = [1, 128], strides = [1, 1]} : vector<1x512xf32> to vector<1x128xf32>
      %48 = math.tanh %47 : vector<1x128xf32>
      %49 = vector.extract_strided_slice %34 {offsets = [0, 384], sizes = [1, 128], strides = [1, 1]} : vector<1x512xf32> to vector<1x128xf32>
      %50 = arith.negf %49 : vector<1x128xf32>
      %51 = math.exp %50 : vector<1x128xf32>
      %cst_31 = arith.constant 1.000000e+00 : f32
      %52 = vector.broadcast %cst_31 : f32 to vector<1x128xf32>
      %53 = arith.addf %52, %51 : vector<1x128xf32>
      %54 = arith.divf %52, %53 : vector<1x128xf32>
      %55 = arith.mulf %46, %arg14 : vector<1x128xf32>
      %56 = arith.mulf %40, %48 : vector<1x128xf32>
      %57 = arith.addf %55, %56 : vector<1x128xf32>
      %58 = math.tanh %57 : vector<1x128xf32>
      %59 = arith.mulf %54, %58 : vector<1x128xf32>
      scf.yield %59, %57 : vector<1x128xf32>, vector<1x128xf32>
    }
    %c8_i32_11 = arith.constant 8 : i32
    %c0_i32_12 = arith.constant 0 : i32
    %16 = tpu.memref_slice %arg11[%c0_i32_12] : memref<2x!tpu.dma_semaphore, #tpu.memory_space<semaphore_mem>> -> memref<1x!tpu.dma_semaphore, #tpu.memory_space<semaphore_mem>>
    %17 = tpu.memref_squeeze %16 : memref<1x!tpu.dma_semaphore, #tpu.memory_space<semaphore_mem>> -> memref<!tpu.dma_semaphore, #tpu.memory_space<semaphore_mem>>
    tpu.wait_dma2 semaphore(%17 : memref<!tpu.dma_semaphore, #tpu.memory_space<semaphore_mem>>) src(%arg5 : memref<128x512xbf16, #tpu.memory_space<any>>) dst(%arg9 : memref<128x512xbf16, #tpu.memory_space<vmem>>)
    %c1_i32_13 = arith.constant 1 : i32
    %18 = tpu.memref_slice %arg11[%c1_i32_13] : memref<2x!tpu.dma_semaphore, #tpu.memory_space<semaphore_mem>> -> memref<1x!tpu.dma_semaphore, #tpu.memory_space<semaphore_mem>>
    %19 = tpu.memref_squeeze %18 : memref<1x!tpu.dma_semaphore, #tpu.memory_space<semaphore_mem>> -> memref<!tpu.dma_semaphore, #tpu.memory_space<semaphore_mem>>
    tpu.wait_dma2 semaphore(%19 : memref<!tpu.dma_semaphore, #tpu.memory_space<semaphore_mem>>) src(%arg6 : memref<128x512xbf16, #tpu.memory_space<any>>) dst(%arg10 : memref<128x512xbf16, #tpu.memory_space<vmem>>)
    %20 = arith.truncf %15#0 : vector<1x128xf32> to vector<1x128xbf16>
    %c0_14 = arith.constant 0 : index
    %c0_15 = arith.constant 0 : index
    %21 = vector.load %arg9[%c0_14, %c0_15] : memref<128x512xbf16, #tpu.memory_space<vmem>>, vector<128x512xbf16>
    %cst_16 = arith.constant dense<0.000000e+00> : vector<1x512xf32>
    %22 = tpu.matmul %20, %21, %cst_16 {dimension_numbers = #tpu.dot_dimension_numbers<[1], [0], [0], [1], [0, 0, 1, 1], [], []>} : vector<1x128xbf16>, vector<128x512xbf16>, vector<1x512xf32> -> vector<1x512xf32>
    %c0_17 = arith.constant 0 : index
    %c0_18 = arith.constant 0 : index
    %23 = vector.load %arg4[%c0_17, %c0_18] : memref<1x512xf32, #tpu.memory_space<vmem>>, vector<1x512xf32>
    %24 = arith.addf %22, %23 : vector<1x512xf32>
    %cst_19 = arith.constant 0.000000e+00 : f32
    %25 = vector.broadcast %cst_19 : f32 to vector<1x128xf32>
    %cst_20 = arith.constant 0.000000e+00 : f32
    %26 = vector.broadcast %cst_20 : f32 to vector<1x128xf32>
    %c0_i32_21 = arith.constant 0 : i32
    %c8_i32_22 = arith.constant 8 : i32
    %27 = arith.addi %c0_i32_21, %c8_i32_22 : i32
    %c1_i32_23 = arith.constant 1 : i32
    %28:2 = scf.for %arg12 = %c0_i32_21 to %27 step %c1_i32_23 iter_args(%arg13 = %25, %arg14 = %26) -> (vector<1x128xf32>, vector<1x128xf32>)  : i32 {
      %29 = arith.truncf %arg13 : vector<1x128xf32> to vector<1x128xbf16>
      %c0_25 = arith.constant 0 : index
      %c0_26 = arith.constant 0 : index
      %30 = vector.load %arg10[%c0_25, %c0_26] : memref<128x512xbf16, #tpu.memory_space<vmem>>, vector<128x512xbf16>
      %cst_27 = arith.constant dense<0.000000e+00> : vector<1x512xf32>
      %31 = tpu.matmul %29, %30, %cst_27 {dimension_numbers = #tpu.dot_dimension_numbers<[1], [0], [0], [1], [0, 0, 1, 1], [], []>} : vector<1x128xbf16>, vector<128x512xbf16>, vector<1x512xf32> -> vector<1x512xf32>
      %32 = arith.addf %24, %31 : vector<1x512xf32>
      %33 = vector.extract_strided_slice %32 {offsets = [0, 0], sizes = [1, 128], strides = [1, 1]} : vector<1x512xf32> to vector<1x128xf32>
      %34 = arith.negf %33 : vector<1x128xf32>
      %35 = math.exp %34 : vector<1x128xf32>
      %cst_28 = arith.constant 1.000000e+00 : f32
      %36 = vector.broadcast %cst_28 : f32 to vector<1x128xf32>
      %37 = arith.addf %36, %35 : vector<1x128xf32>
      %38 = arith.divf %36, %37 : vector<1x128xf32>
      %39 = vector.extract_strided_slice %32 {offsets = [0, 128], sizes = [1, 128], strides = [1, 1]} : vector<1x512xf32> to vector<1x128xf32>
      %40 = arith.negf %39 : vector<1x128xf32>
      %41 = math.exp %40 : vector<1x128xf32>
      %cst_29 = arith.constant 1.000000e+00 : f32
      %42 = vector.broadcast %cst_29 : f32 to vector<1x128xf32>
      %43 = arith.addf %42, %41 : vector<1x128xf32>
      %44 = arith.divf %42, %43 : vector<1x128xf32>
      %45 = vector.extract_strided_slice %32 {offsets = [0, 256], sizes = [1, 128], strides = [1, 1]} : vector<1x512xf32> to vector<1x128xf32>
      %46 = math.tanh %45 : vector<1x128xf32>
      %47 = vector.extract_strided_slice %32 {offsets = [0, 384], sizes = [1, 128], strides = [1, 1]} : vector<1x512xf32> to vector<1x128xf32>
      %48 = arith.negf %47 : vector<1x128xf32>
      %49 = math.exp %48 : vector<1x128xf32>
      %cst_30 = arith.constant 1.000000e+00 : f32
      %50 = vector.broadcast %cst_30 : f32 to vector<1x128xf32>
      %51 = arith.addf %50, %49 : vector<1x128xf32>
      %52 = arith.divf %50, %51 : vector<1x128xf32>
      %53 = arith.mulf %44, %arg14 : vector<1x128xf32>
      %54 = arith.mulf %38, %46 : vector<1x128xf32>
      %55 = arith.addf %53, %54 : vector<1x128xf32>
      %56 = math.tanh %55 : vector<1x128xf32>
      %57 = arith.mulf %52, %56 : vector<1x128xf32>
      %58 = arith.index_cast %arg12 : i32 to index
      %c0_31 = arith.constant 0 : index
      %59 = vector.load %arg7[%58, %c0_31] : memref<8x128xf32, #tpu.memory_space<vmem>>, vector<1x128xf32>
      tpu.vector_store %arg7[%58, %c0_31], %57 {strides = array<i32>} : memref<8x128xf32, #tpu.memory_space<vmem>>, vector<1x128xf32>,
      scf.yield %57, %55 : vector<1x128xf32>, vector<1x128xf32>
    }
    %c8_i32_24 = arith.constant 8 : i32
    return
  }
}

</mosaic_0001>

<llo_original>
// kernel: aiav_forward.1
$region0: #{aiav_forward.1}
  #allocation0 [shape = 'u32[]', space=smem, size = 0x4, offset = 0x4, fixed_abs, tag = 'smem constant byte address 0x4 - core index']
  #allocation1 [shape = 'u32[72,128]{1,0:T(1,128)}', space=vmem, size = 0x9000, scoped, tag = 'internal scratch']
  #allocation2 [shape = 'f32[8,512]{1,0:T(8,128)}', space=vmem, size = 0x4000, scoped, tag = 'scratch operand']
  #allocation3 [shape = 'bf16[128,512]{1,0:T(8,128)(2,1)}', space=vmem, size = 0x20000, scoped, tag = 'scratch operand']
  #allocation4 [shape = 'bf16[128,512]{1,0:T(8,128)(2,1)}', space=vmem, size = 0x20000, scoped, tag = 'scratch operand']
  #allocation5 [shape = 's32[2]{0}', space=sflag, size = 0x8, scoped, tag = 'scratch operand']
  #allocation8 [shape = 's32[]', space=sflag, size = 0x4, offset = 0, fixed_abs, tag = 'sflag constant byte address 0x0 - dummy sync flag']
  #allocation9 [shape = 's32[]', space=sflag, size = 0x4, offset = 0, fixed_abs, tag = 'sflag constant byte address 0x0 - dummy sync flag']
  %s0 = inlined_call_operand.vmem [shape: f32[8,128], index: 0, kind: input, shape index: {}]
  %s1 = inlined_call_operand.vmem [shape: bf16[128,512], index: 1, kind: input, shape index: {}]
  %s2 = inlined_call_operand.vmem [shape: bf16[128,512], index: 2, kind: input, shape index: {}]
  %s3 = inlined_call_operand.vmem [shape: f32[1,512], index: 3, kind: input, shape index: {}]
  %s4 = inlined_call_operand.vmem [shape: f32[1,512], index: 4, kind: input, shape index: {}]
  %s5 = inlined_call_operand.vmem [shape: bf16[128,512], index: 5, kind: input, shape index: {}]
  %s6 = inlined_call_operand.vmem [shape: bf16[128,512], index: 6, kind: input, shape index: {}]
  %s7 = inlined_call_operand.hbm [shape: f32[8,128], index: 7, kind: output, shape index: {}]
  %s8 = sld [smem:[#allocation0]]
  $region82: #{aiav_forward.1} parent=0
    _
  %s10 = ssub.s32 1, %s8
  %s11 = scalar_select 0, %s10, %s8
  $region1: #{aiav_forward.1} parent=0
    #allocation6 [shape = 'u8[4096]{0}', space=vmem, size = 0x1000, scoped, tag = 'output window, operand 0, single buffered']
    #allocation7 [shape = 's32[1]{0}', space=sflag, size = 0x4, scoped, tag = 'scoped memory for aiav_forward.1']
    %12 = vsyncpa [#allocation7], 0
    // Predicated region
    $region2: #{aiav_forward.1} parent=1 // pred_check
      _
    $region3: #{aiav_forward.1} parent=1 // pred_check_branch
      %14 = sbr.rel (0) target = $region5
    $region4: #{aiav_forward.1} parent=1 // pred_region
      _
    $region5: #{aiav_forward.1} parent=1 // pred_fallthru
      _
    // Predicated region
    $region6: #{aiav_forward.1} parent=1 // pred_check
      _
    $region7: #{aiav_forward.1} parent=1 // pred_check_branch
      %16 = sbr.rel (0) target = $region9
    $region8: #{aiav_forward.1} parent=1 // pred_region
      _
    $region9: #{aiav_forward.1} parent=1 // pred_fallthru
      _
    // Predicated region
    $region10: #{aiav_forward.1} parent=1 // pred_check
      _
    $region11: #{aiav_forward.1} parent=1 // pred_check_branch
      %18 = sbr.rel (0) target = $region13
    $region12: #{aiav_forward.1} parent=1 // pred_region
      _
    $region13: #{aiav_forward.1} parent=1 // pred_fallthru
      _
    // Predicated region
    $region14: #{aiav_forward.1} parent=1 // pred_check
      _
    $region15: #{aiav_forward.1} parent=1 // pred_check_branch
      %20 = sbr.rel (0) target = $region17
    $region16: #{aiav_forward.1} parent=1 // pred_region
      _
    $region17: #{aiav_forward.1} parent=1 // pred_fallthru
      _
    // Predicated region
    $region18: #{aiav_forward.1} parent=1 // pred_check
      _
    $region19: #{aiav_forward.1} parent=1 // pred_check_branch
      %22 = sbr.rel (0) target = $region21
    $region20: #{aiav_forward.1} parent=1 // pred_region
      _
    $region21: #{aiav_forward.1} parent=1 // pred_fallthru
      _
    // Predicated region
    $region22: #{aiav_forward.1} parent=1 // pred_check
      _
    $region23: #{aiav_forward.1} parent=1 // pred_check_branch
      %24 = sbr.rel (0) target = $region25
    $region24: #{aiav_forward.1} parent=1 // pred_region
      loop: start=0, step=1, limit=1
      $region26: #{aiav_forward.1} parent=24 // loop_pre_header
        _
      $region27: #{aiav_forward.1} parent=24 // loop_header
        %s26 = sphi 0, %s30
        %p27 = scmp.ge.s32.totalorder %s26, 1
        %s31 = sphi %s5, %s5
        %s32 = sphi [#allocation3], [#allocation3]
      $region28: #{aiav_forward.1} parent=24 // loop_header_branch
        %29 = sbr.rel (%p27) target = $region32
      $region29: #{aiav_forward.1} parent=24 // loop_body
        %v33 = vld [vmem:[%s31] sm:$0xff]
        %34 = vst [vmem:[%s32] sm:$0xff] %v33
        %v35 = vld [vmem:[%s31 + $0x8] sm:$0xff]
        %36 = vst [vmem:[%s32 + $0x8] sm:$0xff] %v35
        %v37 = vld [vmem:[%s31 + $0x10] sm:$0xff]
        %38 = vst [vmem:[%s32 + $0x10] sm:$0xff] %v37
        %v39 = vld [vmem:[%s31 + $0x18] sm:$0xff]
        %40 = vst [vmem:[%s32 + $0x18] sm:$0xff] %v39
        %v41 = vld [vmem:[%s31 + $0x20] sm:$0xff]
        %42 = vst [vmem:[%s32 + $0x20] sm:$0xff] %v41
        %v43 = vld [vmem:[%s31 + $0x28] sm:$0xff]
        %44 = vst [vmem:[%s32 + $0x28] sm:$0xff] %v43
        %v45 = vld [vmem:[%s31 + $0x30] sm:$0xff]
        %46 = vst [vmem:[%s32 + $0x30] sm:$0xff] %v45
        %v47 = vld [vmem:[%s31 + $0x38] sm:$0xff]
        %48 = vst [vmem:[%s32 + $0x38] sm:$0xff] %v47
        %v49 = vld [vmem:[%s31 + $0x40] sm:$0xff]
        %50 = vst [vmem:[%s32 + $0x40] sm:$0xff] %v49
        %v51 = vld [vmem:[%s31 + $0x48] sm:$0xff]
        %52 = vst [vmem:[%s32 + $0x48] sm:$0xff] %v51
        %v53 = vld [vmem:[%s31 + $0x50] sm:$0xff]
        %54 = vst [vmem:[%s32 + $0x50] sm:$0xff] %v53
        %v55 = vld [vmem:[%s31 + $0x58] sm:$0xff]
        %56 = vst [vmem:[%s32 + $0x58] sm:$0xff] %v55
        %v57 = vld [vmem:[%s31 + $0x60] sm:$0xff]
        %58 = vst [vmem:[%s32 + $0x60] sm:$0xff] %v57
        %v59 = vld [vmem:[%s31 + $0x68] sm:$0xff]
        %60 = vst [vmem:[%s32 + $0x68] sm:$0xff] %v59
        %v61 = vld [vmem:[%s31 + $0x70] sm:$0xff]
        %62 = vst [vmem:[%s32 + $0x70] sm:$0xff] %v61
        %v63 = vld [vmem:[%s31 + $0x78] sm:$0xff]
        %64 = vst [vmem:[%s32 + $0x78] sm:$0xff] %v63
        %v65 = vld [vmem:[%s31 + $0x80] sm:$0xff]
        %66 = vst [vmem:[%s32 + $0x80] sm:$0xff] %v65
        %v67 = vld [vmem:[%s31 + $0x88] sm:$0xff]
        %68 = vst [vmem:[%s32 + $0x88] sm:$0xff] %v67
        %v69 = vld [vmem:[%s31 + $0x90] sm:$0xff]
        %70 = vst [vmem:[%s32 + $0x90] sm:$0xff] %v69
        %v71 = vld [vmem:[%s31 + $0x98] sm:$0xff]
        %72 = vst [vmem:[%s32 + $0x98] sm:$0xff] %v71
        %v73 = vld [vmem:[%s31 + $0xa0] sm:$0xff]
        %74 = vst [vmem:[%s32 + $0xa0] sm:$0xff] %v73
        %v75 = vld [vmem:[%s31 + $0xa8] sm:$0xff]
        %76 = vst [vmem:[%s32 + $0xa8] sm:$0xff] %v75
        %v77 = vld [vmem:[%s31 + $0xb0] sm:$0xff]
        %78 = vst [vmem:[%s32 + $0xb0] sm:$0xff] %v77
        %v79 = vld [vmem:[%s31 + $0xb8] sm:$0xff]
        %80 = vst [vmem:[%s32 + $0xb8] sm:$0xff] %v79
        %v81 = vld [vmem:[%s31 + $0xc0] sm:$0xff]
        %82 = vst [vmem:[%s32 + $0xc0] sm:$0xff] %v81
        %v83 = vld [vmem:[%s31 + $0xc8] sm:$0xff]
        %84 = vst [vmem:[%s32 + $0xc8] sm:$0xff] %v83
        %v85 = vld [vmem:[%s31 + $0xd0] sm:$0xff]
        %86 = vst [vmem:[%s32 + $0xd0] sm:$0xff] %v85
        %v87 = vld [vmem:[%s31 + $0xd8] sm:$0xff]
        %88 = vst [vmem:[%s32 + $0xd8] sm:$0xff] %v87
        %v89 = vld [vmem:[%s31 + $0xe0] sm:$0xff]
        %90 = vst [vmem:[%s32 + $0xe0] sm:$0xff] %v89
        %v91 = vld [vmem:[%s31 + $0xe8] sm:$0xff]
        %92 = vst [vmem:[%s32 + $0xe8] sm:$0xff] %v91
        %v93 = vld [vmem:[%s31 + $0xf0] sm:$0xff]
        %94 = vst [vmem:[%s32 + $0xf0] sm:$0xff] %v93
        %v95 = vld [vmem:[%s31 + $0xf8] sm:$0xff]
        %96 = vst [vmem:[%s32 + $0xf8] sm:$0xff] %v95
      $region30: #{aiav_forward.1} parent=24 // loop_footer
        %s30 = sadd.s32 1, %s26
      $region31: #{aiav_forward.1} parent=24 // loop_footer_branch
        %25 = sbr.rel target = $region27
      $region32: #{aiav_forward.1} parent=24 // loop_exit
        _
    $region25: #{aiav_forward.1} parent=1 // pred_fallthru
      _
    // Predicated region
    $region33: #{aiav_forward.1} parent=1 // pred_check
      _
    $region34: #{aiav_forward.1} parent=1 // pred_check_branch
      %98 = sbr.rel target = $region36
    $region35: #{aiav_forward.1} parent=1 // pred_region
      _
    $region36: #{aiav_forward.1} parent=1 // pred_fallthru
      _
    // Predicated region
    $region37: #{aiav_forward.1} parent=1 // pred_check
      _
    $region38: #{aiav_forward.1} parent=1 // pred_check_branch
      %101 = sbr.rel (0) target = $region40
    $region39: #{aiav_forward.1} parent=1 // pred_region
      %102 = vsyncadd [#allocation5], 4096
    $region40: #{aiav_forward.1} parent=1 // pred_fallthru
      _
    %s103 = scalar_lea.sflag [#allocation5], 1
    // Predicated region
    $region41: #{aiav_forward.1} parent=1 // pred_check
      _
    $region42: #{aiav_forward.1} parent=1 // pred_check_branch
      %105 = sbr.rel (0) target = $region44
    $region43: #{aiav_forward.1} parent=1 // pred_region
      loop: start=0, step=1, limit=1
      $region45: #{aiav_forward.1} parent=43 // loop_pre_header
        _
      $region46: #{aiav_forward.1} parent=43 // loop_header
        %s107 = sphi 0, %s111
        %p108 = scmp.ge.s32.totalorder %s107, 1
        %s112 = sphi %s6, %s6
        %s113 = sphi [#allocation4], [#allocation4]
      $region47: #{aiav_forward.1} parent=43 // loop_header_branch
        %110 = sbr.rel (%p108) target = $region51
      $region48: #{aiav_forward.1} parent=43 // loop_body
        %v114 = vld [vmem:[%s112] sm:$0xff]
        %115 = vst [vmem:[%s113] sm:$0xff] %v114
        %v116 = vld [vmem:[%s112 + $0x8] sm:$0xff]
        %117 = vst [vmem:[%s113 + $0x8] sm:$0xff] %v116
        %v118 = vld [vmem:[%s112 + $0x10] sm:$0xff]
        %119 = vst [vmem:[%s113 + $0x10] sm:$0xff] %v118
        %v120 = vld [vmem:[%s112 + $0x18] sm:$0xff]
        %121 = vst [vmem:[%s113 + $0x18] sm:$0xff] %v120
        %v122 = vld [vmem:[%s112 + $0x20] sm:$0xff]
        %123 = vst [vmem:[%s113 + $0x20] sm:$0xff] %v122
        %v124 = vld [vmem:[%s112 + $0x28] sm:$0xff]
        %125 = vst [vmem:[%s113 + $0x28] sm:$0xff] %v124
        %v126 = vld [vmem:[%s112 + $0x30] sm:$0xff]
        %127 = vst [vmem:[%s113 + $0x30] sm:$0xff] %v126
        %v128 = vld [vmem:[%s112 + $0x38] sm:$0xff]
        %129 = vst [vmem:[%s113 + $0x38] sm:$0xff] %v128
        %v130 = vld [vmem:[%s112 + $0x40] sm:$0xff]
        %131 = vst [vmem:[%s113 + $0x40] sm:$0xff] %v130
        %v132 = vld [vmem:[%s112 + $0x48] sm:$0xff]
        %133 = vst [vmem:[%s113 + $0x48] sm:$0xff] %v132
        %v134 = vld [vmem:[%s112 + $0x50] sm:$0xff]
        %135 = vst [vmem:[%s113 + $0x50] sm:$0xff] %v134
        %v136 = vld [vmem:[%s112 + $0x58] sm:$0xff]
        %137 = vst [vmem:[%s113 + $0x58] sm:$0xff] %v136
        %v138 = vld [vmem:[%s112 + $0x60] sm:$0xff]
        %139 = vst [vmem:[%s113 + $0x60] sm:$0xff] %v138
        %v140 = vld [vmem:[%s112 + $0x68] sm:$0xff]
        %141 = vst [vmem:[%s113 + $0x68] sm:$0xff] %v140
        %v142 = vld [vmem:[%s112 + $0x70] sm:$0xff]
        %143 = vst [vmem:[%s113 + $0x70] sm:$0xff] %v142
        %v144 = vld [vmem:[%s112 + $0x78] sm:$0xff]
        %145 = vst [vmem:[%s113 + $0x78] sm:$0xff] %v144
        %v146 = vld [vmem:[%s112 + $0x80] sm:$0xff]
        %147 = vst [vmem:[%s113 + $0x80] sm:$0xff] %v146
        %v148 = vld [vmem:[%s112 + $0x88] sm:$0xff]
        %149 = vst [vmem:[%s113 + $0x88] sm:$0xff] %v148
        %v150 = vld [vmem:[%s112 + $0x90] sm:$0xff]
        %151 = vst [vmem:[%s113 + $0x90] sm:$0xff] %v150
        %v152 = vld [vmem:[%s112 + $0x98] sm:$0xff]
        %153 = vst [vmem:[%s113 + $0x98] sm:$0xff] %v152
        %v154 = vld [vmem:[%s112 + $0xa0] sm:$0xff]
        %155 = vst [vmem:[%s113 + $0xa0] sm:$0xff] %v154
        %v156 = vld [vmem:[%s112 + $0xa8] sm:$0xff]
        %157 = vst [vmem:[%s113 + $0xa8] sm:$0xff] %v156
        %v158 = vld [vmem:[%s112 + $0xb0] sm:$0xff]
        %159 = vst [vmem:[%s113 + $0xb0] sm:$0xff] %v158
        %v160 = vld [vmem:[%s112 + $0xb8] sm:$0xff]
        %161 = vst [vmem:[%s113 + $0xb8] sm:$0xff] %v160
        %v162 = vld [vmem:[%s112 + $0xc0] sm:$0xff]
        %163 = vst [vmem:[%s113 + $0xc0] sm:$0xff] %v162
        %v164 = vld [vmem:[%s112 + $0xc8] sm:$0xff]
        %165 = vst [vmem:[%s113 + $0xc8] sm:$0xff] %v164
        %v166 = vld [vmem:[%s112 + $0xd0] sm:$0xff]
        %167 = vst [vmem:[%s113 + $0xd0] sm:$0xff] %v166
        %v168 = vld [vmem:[%s112 + $0xd8] sm:$0xff]
        %169 = vst [vmem:[%s113 + $0xd8] sm:$0xff] %v168
        %v170 = vld [vmem:[%s112 + $0xe0] sm:$0xff]
        %171 = vst [vmem:[%s113 + $0xe0] sm:$0xff] %v170
        %v172 = vld [vmem:[%s112 + $0xe8] sm:$0xff]
        %173 = vst [vmem:[%s113 + $0xe8] sm:$0xff] %v172
        %v174 = vld [vmem:[%s112 + $0xf0] sm:$0xff]
        %175 = vst [vmem:[%s113 + $0xf0] sm:$0xff] %v174
        %v176 = vld [vmem:[%s112 + $0xf8] sm:$0xff]
        %177 = vst [vmem:[%s113 + $0xf8] sm:$0xff] %v176
      $region49: #{aiav_forward.1} parent=43 // loop_footer
        %s111 = sadd.s32 1, %s107
      $region50: #{aiav_forward.1} parent=43 // loop_footer_branch
        %106 = sbr.rel target = $region46
      $region51: #{aiav_forward.1} parent=43 // loop_exit
        _
    $region44: #{aiav_forward.1} parent=1 // pred_fallthru
      _
    // Predicated region
    $region52: #{aiav_forward.1} parent=1 // pred_check
      _
    $region53: #{aiav_forward.1} parent=1 // pred_check_branch
      %179 = sbr.rel target = $region55
    $region54: #{aiav_forward.1} parent=1 // pred_region
      _
    $region55: #{aiav_forward.1} parent=1 // pred_fallthru
      _
    // Predicated region
    $region56: #{aiav_forward.1} parent=1 // pred_check
      _
    $region57: #{aiav_forward.1} parent=1 // pred_check_branch
      %182 = sbr.rel (0) target = $region59
    $region58: #{aiav_forward.1} parent=1 // pred_region
      %183 = vsyncadd %s103, 4096
    $region59: #{aiav_forward.1} parent=1 // pred_fallthru
      _
    %v184 = vld [vmem:[%s0] sm:$0xff]
    %v185 = vpack.c.bf16 %v184, %v184
    %v186 = vld [vmem:[%s1] sm:$0xff]
    %v187 = vld [vmem:[%s1 + $0x8] sm:$0xff]
    %v188 = vld [vmem:[%s1 + $0x10] sm:$0xff]
    %v189 = vld [vmem:[%s1 + $0x18] sm:$0xff]
    %v190 = vld [vmem:[%s1 + $0x20] sm:$0xff]
    %v191 = vld [vmem:[%s1 + $0x28] sm:$0xff]
    %v192 = vld [vmem:[%s1 + $0x30] sm:$0xff]
    %v193 = vld [vmem:[%s1 + $0x38] sm:$0xff]
    %v194 = vld [vmem:[%s1 + $0x40] sm:$0xff]
    %v195 = vld [vmem:[%s1 + $0x48] sm:$0xff]
    %v196 = vld [vmem:[%s1 + $0x50] sm:$0xff]
    %v197 = vld [vmem:[%s1 + $0x58] sm:$0xff]
    %v198 = vld [vmem:[%s1 + $0x60] sm:$0xff]
    %v199 = vld [vmem:[%s1 + $0x68] sm:$0xff]
    %v200 = vld [vmem:[%s1 + $0x70] sm:$0xff]
    %v201 = vld [vmem:[%s1 + $0x78] sm:$0xff]
    %v202 = vld [vmem:[%s1 + $0x80] sm:$0xff]
    %v203 = vld [vmem:[%s1 + $0x88] sm:$0xff]
    %v204 = vld [vmem:[%s1 + $0x90] sm:$0xff]
    %v205 = vld [vmem:[%s1 + $0x98] sm:$0xff]
    %v206 = vld [vmem:[%s1 + $0xa0] sm:$0xff]
    %v207 = vld [vmem:[%s1 + $0xa8] sm:$0xff]
    %v208 = vld [vmem:[%s1 + $0xb0] sm:$0xff]
    %v209 = vld [vmem:[%s1 + $0xb8] sm:$0xff]
    %v210 = vld [vmem:[%s1 + $0xc0] sm:$0xff]
    %v211 = vld [vmem:[%s1 + $0xc8] sm:$0xff]
    %v212 = vld [vmem:[%s1 + $0xd0] sm:$0xff]
    %v213 = vld [vmem:[%s1 + $0xd8] sm:$0xff]
    %v214 = vld [vmem:[%s1 + $0xe0] sm:$0xff]
    %v215 = vld [vmem:[%s1 + $0xe8] sm:$0xff]
    %v216 = vld [vmem:[%s1 + $0xf0] sm:$0xff]
    %v217 = vld [vmem:[%s1 + $0xf8] sm:$0xff]
    %v218 = vld [vmem:[%s3] sm:$0xf]
    %v220 = vperm.slane %v218, 0
    %v221 = vperm.slane %v218, 1
    %v222 = vperm.slane %v218, 2
    %v223 = vperm.slane %v218, 3
    %v260 = vunpack.c.l.b16 %v186
    %v261 = vunpack.c.h.b16 %v186
    %v262 = vunpack.c.l.b16 %v187
    %v263 = vunpack.c.h.b16 %v187
    %v264 = vunpack.c.l.b16 %v188
    %v265 = vunpack.c.h.b16 %v188
    %v266 = vunpack.c.l.b16 %v189
    %v267 = vunpack.c.h.b16 %v189
    %v268 = vunpack.c.l.b16 %v190
    %v269 = vunpack.c.h.b16 %v190
    %v270 = vunpack.c.l.b16 %v191
    %v271 = vunpack.c.h.b16 %v191
    %v272 = vunpack.c.l.b16 %v192
    %v273 = vunpack.c.h.b16 %v192
    %v274 = vunpack.c.l.b16 %v193
    %v275 = vunpack.c.h.b16 %v193
    %v276 = vunpack.c.l.b16 %v194
    %v277 = vunpack.c.h.b16 %v194
    %v278 = vunpack.c.l.b16 %v195
    %v279 = vunpack.c.h.b16 %v195
    %v280 = vunpack.c.l.b16 %v196
    %v281 = vunpack.c.h.b16 %v196
    %v282 = vunpack.c.l.b16 %v197
    %v283 = vunpack.c.h.b16 %v197
    %v284 = vunpack.c.l.b16 %v198
    %v285 = vunpack.c.h.b16 %v198
    %v286 = vunpack.c.l.b16 %v199
    %v287 = vunpack.c.h.b16 %v199
    %v288 = vunpack.c.l.b16 %v200
    %v289 = vunpack.c.h.b16 %v200
    %v290 = vunpack.c.l.b16 %v201
    %v291 = vunpack.c.h.b16 %v201
    %v292 = vunpack.c.l.b16 %v202
    %v293 = vunpack.c.h.b16 %v202
    %v294 = vunpack.c.l.b16 %v203
    %v295 = vunpack.c.h.b16 %v203
    %v296 = vunpack.c.l.b16 %v204
    %v297 = vunpack.c.h.b16 %v204
    %v298 = vunpack.c.l.b16 %v205
    %v299 = vunpack.c.h.b16 %v205
    %v300 = vunpack.c.l.b16 %v206
    %v301 = vunpack.c.h.b16 %v206
    %v302 = vunpack.c.l.b16 %v207
    %v303 = vunpack.c.h.b16 %v207
    %v304 = vunpack.c.l.b16 %v208
    %v305 = vunpack.c.h.b16 %v208
    %v306 = vunpack.c.l.b16 %v209
    %v307 = vunpack.c.h.b16 %v209
    %v308 = vunpack.c.l.b16 %v210
    %v309 = vunpack.c.h.b16 %v210
    %v310 = vunpack.c.l.b16 %v211
    %v311 = vunpack.c.h.b16 %v211
    %v312 = vunpack.c.l.b16 %v212
    %v313 = vunpack.c.h.b16 %v212
    %v314 = vunpack.c.l.b16 %v213
    %v315 = vunpack.c.h.b16 %v213
    %v316 = vunpack.c.l.b16 %v214
    %v317 = vunpack.c.h.b16 %v214
    %v318 = vunpack.c.l.b16 %v215
    %v319 = vunpack.c.h.b16 %v215
    %v320 = vunpack.c.l.b16 %v216
    %v321 = vunpack.c.h.b16 %v216
    %v322 = vunpack.c.l.b16 %v217
    %v323 = vunpack.c.h.b16 %v217
    %v324 = vpack.c.b16 %v264, %v260
    %v325 = vpack.c.b16 %v265, %v261
    %v326 = vpack.c.b16 %v266, %v262
    %v327 = vpack.c.b16 %v267, %v263
    %v328 = vpack.c.b16 %v272, %v268
    %v329 = vpack.c.b16 %v273, %v269
    %v330 = vpack.c.b16 %v274, %v270
    %v331 = vpack.c.b16 %v275, %v271
    %v332 = vpack.c.b16 %v280, %v276
    %v333 = vpack.c.b16 %v281, %v277
    %v334 = vpack.c.b16 %v282, %v278
    %v335 = vpack.c.b16 %v283, %v279
    %v336 = vpack.c.b16 %v288, %v284
    %v337 = vpack.c.b16 %v289, %v285
    %v338 = vpack.c.b16 %v290, %v286
    %v339 = vpack.c.b16 %v291, %v287
    %v340 = vpack.c.b16 %v296, %v292
    %v341 = vpack.c.b16 %v297, %v293
    %v342 = vpack.c.b16 %v298, %v294
    %v343 = vpack.c.b16 %v299, %v295
    %v344 = vpack.c.b16 %v304, %v300
    %v345 = vpack.c.b16 %v305, %v301
    %v346 = vpack.c.b16 %v306, %v302
    %v347 = vpack.c.b16 %v307, %v303
    %v348 = vpack.c.b16 %v312, %v308
    %v349 = vpack.c.b16 %v313, %v309
    %v350 = vpack.c.b16 %v314, %v310
    %v351 = vpack.c.b16 %v315, %v311
    %v352 = vpack.c.b16 %v320, %v316
    %v353 = vpack.c.b16 %v321, %v317
    %v354 = vpack.c.b16 %v322, %v318
    %v355 = vpack.c.b16 %v323, %v319
    %388 = vmatpush.bf16.msra.mxu0 %v352
    %389 = vmatpush.bf16.msra.mxu0 %v348
    %390 = vmatpush.bf16.msra.mxu0 %v344
    %391 = vmatpush.bf16.msra.mxu0 %v340
    %392 = vmatpush.bf16.msra.mxu0 %v336
    %393 = vmatpush.bf16.msra.mxu0 %v332
    %394 = vmatpush.bf16.msra.mxu0 %v328
    %395 = vmatpush.bf16.msra.mxu0 %v324
    %396 = vmatmul.bf16.gmra.mxu0 %v185
    %v397 = vpop.f32.mrf.mxu0
    %v398 = vadd.f32 %v220, %v397
    %v399 = vpop.f32.mrf.mxu0
    %400 = vdwg.mxu0
    %401 = vmatpush.bf16.msra.mxu0 %v353
    %402 = vmatpush.bf16.msra.mxu0 %v349
    %403 = vmatpush.bf16.msra.mxu0 %v345
    %404 = vmatpush.bf16.msra.mxu0 %v341
    %405 = vmatpush.bf16.msra.mxu0 %v337
    %406 = vmatpush.bf16.msra.mxu0 %v333
    %407 = vmatpush.bf16.msra.mxu0 %v329
    %408 = vmatpush.bf16.msra.mxu0 %v325
    %409 = vmatmul.bf16.gmra.mxu0 %v185
    %v410 = vpop.f32.mrf.mxu0
    %v411 = vadd.f32 %v221, %v410
    %v412 = vpop.f32.mrf.mxu0
    %413 = vdwg.mxu0
    %414 = vmatpush.bf16.msra.mxu0 %v354
    %415 = vmatpush.bf16.msra.mxu0 %v350
    %416 = vmatpush.bf16.msra.mxu0 %v346
    %417 = vmatpush.bf16.msra.mxu0 %v342
    %418 = vmatpush.bf16.msra.mxu0 %v338
    %419 = vmatpush.bf16.msra.mxu0 %v334
    %420 = vmatpush.bf16.msra.mxu0 %v330
    %421 = vmatpush.bf16.msra.mxu0 %v326
    %422 = vmatmul.bf16.gmra.mxu0 %v185
    %v423 = vpop.f32.mrf.mxu0
    %v424 = vadd.f32 %v222, %v423
    %v425 = vpop.f32.mrf.mxu0
    %426 = vdwg.mxu0
    %427 = vmatpush.bf16.msra.mxu0 %v355
    %428 = vmatpush.bf16.msra.mxu0 %v351
    %429 = vmatpush.bf16.msra.mxu0 %v347
    %430 = vmatpush.bf16.msra.mxu0 %v343
    %431 = vmatpush.bf16.msra.mxu0 %v339
    %432 = vmatpush.bf16.msra.mxu0 %v335
    %433 = vmatpush.bf16.msra.mxu0 %v331
    %434 = vmatpush.bf16.msra.mxu0 %v327
    %435 = vmatmul.bf16.gmra.mxu0 %v185
    %v436 = vpop.f32.mrf.mxu0
    %v437 = vadd.f32 %v223, %v436
    %v438 = vpop.f32.mrf.mxu0
    %439 = vdwg.mxu0
    %440 = vst [vmem:[#allocation2] sm:$0xff] %v398
    %441 = vst [vmem:[#allocation2 + $0x8] sm:$0xff] %v411
    %442 = vst [vmem:[#allocation2 + $0x10] sm:$0xff] %v424
    %443 = vst [vmem:[#allocation2 + $0x18] sm:$0xff] %v437
    loop: start=0, step=1, limit=8
    $region60: #{aiav_forward.1} parent=1 // loop_pre_header
      _
    $region61: #{aiav_forward.1} parent=1 // loop_header
      %s445 = sphi 0, %s449
      %p446 = scmp.ge.s32.totalorder %s445, 8
      %v450 = vphi 0.0, %v790
      %v451 = vphi 0.0, %v788
    $region62: #{aiav_forward.1} parent=1 // loop_header_branch
      %448 = sbr.rel (%p446) target = $region66
    $region63: #{aiav_forward.1} parent=1 // loop_body
      %s452 = sshra.s32 %s445, 3
      %s453 = sand.u32 %s445, 7
      %s454 = sshra.s32 %s445, 3
      %s455 = sand.u32 %s445, 7
      %s456 = smul.u32 %s452, 4
      %s457 = smul.u32 %s456, 8
      %s458 = sadd.s32 %s457, %s455
      %s459 = scalar_lea.vmem [#allocation2], %s458
      %v460 = vld [vmem:[%s459] ss:$8 sm:$0xf]
      %v461 = vpack.c.bf16 %v450, %v450
      %v462 = vld [vmem:[%s2] sm:$0xff]
      %v463 = vld [vmem:[%s2 + $0x8] sm:$0xff]
      %v464 = vld [vmem:[%s2 + $0x10] sm:$0xff]
      %v465 = vld [vmem:[%s2 + $0x18] sm:$0xff]
      %v466 = vld [vmem:[%s2 + $0x20] sm:$0xff]
      %v467 = vld [vmem:[%s2 + $0x28] sm:$0xff]
      %v468 = vld [vmem:[%s2 + $0x30] sm:$0xff]
      %v469 = vld [vmem:[%s2 + $0x38] sm:$0xff]
      %v470 = vld [vmem:[%s2 + $0x40] sm:$0xff]
      %v471 = vld [vmem:[%s2 + $0x48] sm:$0xff]
      %v472 = vld [vmem:[%s2 + $0x50] sm:$0xff]
      %v473 = vld [vmem:[%s2 + $0x58] sm:$0xff]
      %v474 = vld [vmem:[%s2 + $0x60] sm:$0xff]
      %v475 = vld [vmem:[%s2 + $0x68] sm:$0xff]
      %v476 = vld [vmem:[%s2 + $0x70] sm:$0xff]
      %v477 = vld [vmem:[%s2 + $0x78] sm:$0xff]
      %v478 = vld [vmem:[%s2 + $0x80] sm:$0xff]
      %v479 = vld [vmem:[%s2 + $0x88] sm:$0xff]
      %v480 = vld [vmem:[%s2 + $0x90] sm:$0xff]
      %v481 = vld [vmem:[%s2 + $0x98] sm:$0xff]
      %v482 = vld [vmem:[%s2 + $0xa0] sm:$0xff]
      %v483 = vld [vmem:[%s2 + $0xa8] sm:$0xff]
      %v484 = vld [vmem:[%s2 + $0xb0] sm:$0xff]
      %v485 = vld [vmem:[%s2 + $0xb8] sm:$0xff]
      %v486 = vld [vmem:[%s2 + $0xc0] sm:$0xff]
      %v487 = vld [vmem:[%s2 + $0xc8] sm:$0xff]
      %v488 = vld [vmem:[%s2 + $0xd0] sm:$0xff]
      %v489 = vld [vmem:[%s2 + $0xd8] sm:$0xff]
      %v490 = vld [vmem:[%s2 + $0xe0] sm:$0xff]
      %v491 = vld [vmem:[%s2 + $0xe8] sm:$0xff]
      %v492 = vld [vmem:[%s2 + $0xf0] sm:$0xff]
      %v493 = vld [vmem:[%s2 + $0xf8] sm:$0xff]
      %v526 = vunpack.c.l.b16 %v462
      %v527 = vunpack.c.h.b16 %v462
      %v528 = vunpack.c.l.b16 %v463
      %v529 = vunpack.c.h.b16 %v463
      %v530 = vunpack.c.l.b16 %v464
      %v531 = vunpack.c.h.b16 %v464
      %v532 = vunpack.c.l.b16 %v465
      %v533 = vunpack.c.h.b16 %v465
      %v534 = vunpack.c.l.b16 %v466
      %v535 = vunpack.c.h.b16 %v466
      %v536 = vunpack.c.l.b16 %v467
      %v537 = vunpack.c.h.b16 %v467
      %v538 = vunpack.c.l.b16 %v468
      %v539 = vunpack.c.h.b16 %v468
      %v540 = vunpack.c.l.b16 %v469
      %v541 = vunpack.c.h.b16 %v469
      %v542 = vunpack.c.l.b16 %v470
      %v543 = vunpack.c.h.b16 %v470
      %v544 = vunpack.c.l.b16 %v471
      %v545 = vunpack.c.h.b16 %v471
      %v546 = vunpack.c.l.b16 %v472
      %v547 = vunpack.c.h.b16 %v472
      %v548 = vunpack.c.l.b16 %v473
      %v549 = vunpack.c.h.b16 %v473
      %v550 = vunpack.c.l.b16 %v474
      %v551 = vunpack.c.h.b16 %v474
      %v552 = vunpack.c.l.b16 %v475
      %v553 = vunpack.c.h.b16 %v475
      %v554 = vunpack.c.l.b16 %v476
      %v555 = vunpack.c.h.b16 %v476
      %v556 = vunpack.c.l.b16 %v477
      %v557 = vunpack.c.h.b16 %v477
      %v558 = vunpack.c.l.b16 %v478
      %v559 = vunpack.c.h.b16 %v478
      %v560 = vunpack.c.l.b16 %v479
      %v561 = vunpack.c.h.b16 %v479
      %v562 = vunpack.c.l.b16 %v480
      %v563 = vunpack.c.h.b16 %v480
      %v564 = vunpack.c.l.b16 %v481
      %v565 = vunpack.c.h.b16 %v481
      %v566 = vunpack.c.l.b16 %v482
      %v567 = vunpack.c.h.b16 %v482
      %v568 = vunpack.c.l.b16 %v483
      %v569 = vunpack.c.h.b16 %v483
      %v570 = vunpack.c.l.b16 %v484
      %v571 = vunpack.c.h.b16 %v484
      %v572 = vunpack.c.l.b16 %v485
      %v573 = vunpack.c.h.b16 %v485
      %v574 = vunpack.c.l.b16 %v486
      %v575 = vunpack.c.h.b16 %v486
      %v576 = vunpack.c.l.b16 %v487
      %v577 = vunpack.c.h.b16 %v487
      %v578 = vunpack.c.l.b16 %v488
      %v579 = vunpack.c.h.b16 %v488
      %v580 = vunpack.c.l.b16 %v489
      %v581 = vunpack.c.h.b16 %v489
      %v582 = vunpack.c.l.b16 %v490
      %v583 = vunpack.c.h.b16 %v490
      %v584 = vunpack.c.l.b16 %v491
      %v585 = vunpack.c.h.b16 %v491
      %v586 = vunpack.c.l.b16 %v492
      %v587 = vunpack.c.h.b16 %v492
      %v588 = vunpack.c.l.b16 %v493
      %v589 = vunpack.c.h.b16 %v493
      %v590 = vpack.c.b16 %v530, %v526
      %v591 = vpack.c.b16 %v531, %v527
      %v592 = vpack.c.b16 %v532, %v528
      %v593 = vpack.c.b16 %v533, %v529
      %v594 = vpack.c.b16 %v538, %v534
      %v595 = vpack.c.b16 %v539, %v535
      %v596 = vpack.c.b16 %v540, %v536
      %v597 = vpack.c.b16 %v541, %v537
      %v598 = vpack.c.b16 %v546, %v542
      %v599 = vpack.c.b16 %v547, %v543
      %v600 = vpack.c.b16 %v548, %v544
      %v601 = vpack.c.b16 %v549, %v545
      %v602 = vpack.c.b16 %v554, %v550
      %v603 = vpack.c.b16 %v555, %v551
      %v604 = vpack.c.b16 %v556, %v552
      %v605 = vpack.c.b16 %v557, %v553
      %v606 = vpack.c.b16 %v562, %v558
      %v607 = vpack.c.b16 %v563, %v559
      %v608 = vpack.c.b16 %v564, %v560
      %v609 = vpack.c.b16 %v565, %v561
      %v610 = vpack.c.b16 %v570, %v566
      %v611 = vpack.c.b16 %v571, %v567
      %v612 = vpack.c.b16 %v572, %v568
      %v613 = vpack.c.b16 %v573, %v569
      %v614 = vpack.c.b16 %v578, %v574
      %v615 = vpack.c.b16 %v579, %v575
      %v616 = vpack.c.b16 %v580, %v576
      %v617 = vpack.c.b16 %v581, %v577
      %v618 = vpack.c.b16 %v586, %v582
      %v619 = vpack.c.b16 %v587, %v583
      %v620 = vpack.c.b16 %v588, %v584
      %v621 = vpack.c.b16 %v589, %v585
      %654 = vmatpush.bf16.msra.mxu0 %v618
      %655 = vmatpush.bf16.msra.mxu0 %v614
      %656 = vmatpush.bf16.msra.mxu0 %v610
      %657 = vmatpush.bf16.msra.mxu0 %v606
      %658 = vmatpush.bf16.msra.mxu0 %v602
      %659 = vmatpush.bf16.msra.mxu0 %v598
      %660 = vmatpush.bf16.msra.mxu0 %v594
      %661 = vmatpush.bf16.msra.mxu0 %v590
      %662 = vmatmul.bf16.gmra.mxu0 %v461
      %v663 = vpop.f32.mrf.mxu0
      %v664 = vadd.f32 0.0, %v663
      %v665 = vpop.f32.mrf.mxu0
      %666 = vdwg.mxu0
      %667 = vmatpush.bf16.msra.mxu0 %v619
      %668 = vmatpush.bf16.msra.mxu0 %v615
      %669 = vmatpush.bf16.msra.mxu0 %v611
      %670 = vmatpush.bf16.msra.mxu0 %v607
      %671 = vmatpush.bf16.msra.mxu0 %v603
      %672 = vmatpush.bf16.msra.mxu0 %v599
      %673 = vmatpush.bf16.msra.mxu0 %v595
      %674 = vmatpush.bf16.msra.mxu0 %v591
      %675 = vmatmul.bf16.gmra.mxu0 %v461
      %v676 = vpop.f32.mrf.mxu0
      %v677 = vadd.f32 0.0, %v676
      %v678 = vpop.f32.mrf.mxu0
      %679 = vdwg.mxu0
      %680 = vmatpush.bf16.msra.mxu0 %v620
      %681 = vmatpush.bf16.msra.mxu0 %v616
      %682 = vmatpush.bf16.msra.mxu0 %v612
      %683 = vmatpush.bf16.msra.mxu0 %v608
      %684 = vmatpush.bf16.msra.mxu0 %v604
      %685 = vmatpush.bf16.msra.mxu0 %v600
      %686 = vmatpush.bf16.msra.mxu0 %v596
      %687 = vmatpush.bf16.msra.mxu0 %v592
      %688 = vmatmul.bf16.gmra.mxu0 %v461
      %v689 = vpop.f32.mrf.mxu0
      %v690 = vadd.f32 0.0, %v689
      %v691 = vpop.f32.mrf.mxu0
      %692 = vdwg.mxu0
      %693 = vmatpush.bf16.msra.mxu0 %v621
      %694 = vmatpush.bf16.msra.mxu0 %v617
      %695 = vmatpush.bf16.msra.mxu0 %v613
      %696 = vmatpush.bf16.msra.mxu0 %v609
      %697 = vmatpush.bf16.msra.mxu0 %v605
      %698 = vmatpush.bf16.msra.mxu0 %v601
      %699 = vmatpush.bf16.msra.mxu0 %v597
      %700 = vmatpush.bf16.msra.mxu0 %v593
      %701 = vmatmul.bf16.gmra.mxu0 %v461
      %v702 = vpop.f32.mrf.mxu0
      %v703 = vadd.f32 0.0, %v702
      %v704 = vpop.f32.mrf.mxu0
      %705 = vdwg.mxu0
      %v710 = vrot.slane %v677, 7
      %v711 = vrot.slane %v690, 6
      %v712 = vrot.slane %v703, 5
      %vm713 = vcmask 1040384
      %v714 = vsel %vm713, %v664, %v710
      %vm715 = vcmask 1042434
      %v716 = vsel %vm715, %v711, %v712
      %vm717 = vcmask 1041408
      %v718 = vsel %vm717, %v714, %v716
      %v720 = vadd.f32 %v460, %v718
      %v721 = vxor.u32 %v720, 2147483648
      %v722 = vmul.f32 %v721, 1.442695
      %v723 = vpow.pop %v722
      %v724 = vadd.f32 %v723, 1.0
      %v725 = vrcp.pop %v724
      %v726 = vmul.f32 %v724, %v725
      %v727 = vsub.f32 1.0, %v726
      %v728 = vmul.f32 %v725, %v727
      %v729 = vadd.f32 %v725, %v728
      %vm730 = vweird.f32 %v724
      %vm731 = vweird.f32 %v725
      %vm732 = vmor %vm730, %vm731
      %v733 = vsel %vm732, %v725, %v729
      %v734 = vand.u32 2147483647, %v724
      %vm735 = vcmp.eq.f32.partialorder %v734, 8.507059e+37
      %v736 = vand.u32 %v724, 2147483648
      %v737 = vor.u32 1.1754944e-38, %v736
      %v738 = vsel %vm735, %v737, %v733
      %v739 = vmul.f32 1.0, %v738
      %v741 = vrot.slane %v720, 1
      %v743 = vxor.u32 %v741, 2147483648
      %v744 = vmul.f32 %v743, 1.442695
      %v745 = vpow.pop %v744
      %v746 = vadd.f32 %v745, 1.0
      %v747 = vrcp.pop %v746
      %v748 = vmul.f32 %v746, %v747
      %v749 = vsub.f32 1.0, %v748
      %v750 = vmul.f32 %v747, %v749
      %v751 = vadd.f32 %v747, %v750
      %vm752 = vweird.f32 %v746
      %vm753 = vweird.f32 %v747
      %vm754 = vmor %vm752, %vm753
      %v755 = vsel %vm754, %v747, %v751
      %v756 = vand.u32 2147483647, %v746
      %vm757 = vcmp.eq.f32.partialorder %v756, 8.507059e+37
      %v758 = vand.u32 %v746, 2147483648
      %v759 = vor.u32 1.1754944e-38, %v758
      %v760 = vsel %vm757, %v759, %v755
      %v761 = vmul.f32 1.0, %v760
      %v762 = vrot.slane %v720, 2
      %v764 = vtanh.pop %v762
      %v765 = vrot.slane %v720, 3
      %v767 = vxor.u32 %v765, 2147483648
      %v768 = vmul.f32 %v767, 1.442695
      %v769 = vpow.pop %v768
      %v770 = vadd.f32 %v769, 1.0
      %v771 = vrcp.pop %v770
      %v772 = vmul.f32 %v770, %v771
      %v773 = vsub.f32 1.0, %v772
      %v774 = vmul.f32 %v771, %v773
      %v775 = vadd.f32 %v771, %v774
      %vm776 = vweird.f32 %v770
      %vm777 = vweird.f32 %v771
      %vm778 = vmor %vm776, %vm777
      %v779 = vsel %vm778, %v771, %v775
      %v780 = vand.u32 2147483647, %v770
      %vm781 = vcmp.eq.f32.partialorder %v780, 8.507059e+37
      %v782 = vand.u32 %v770, 2147483648
      %v783 = vor.u32 1.1754944e-38, %v782
      %v784 = vsel %vm781, %v783, %v779
      %v785 = vmul.f32 1.0, %v784
      %v786 = vmul.f32 %v761, %v451
      %v787 = vmul.f32 %v739, %v764
      %v788 = vadd.f32 %v786, %v787
      %v789 = vtanh.pop %v788
      %v790 = vmul.f32 %v785, %v789
    $region64: #{aiav_forward.1} parent=1 // loop_footer
      %s449 = sadd.s32 1, %s445
    $region65: #{aiav_forward.1} parent=1 // loop_footer_branch
      %444 = sbr.rel target = $region61
    $region66: #{aiav_forward.1} parent=1 // loop_exit
      _
    %s791 = smul.u32 4, 16
    %s792 = smul.u32 %s791, 4
    %s793 = sshll.u32 %s792, 4
    %794 = dma.done [#allocation5], %s793
    %s795 = sshll.u32 %s792, 4
    %796 = dma.done %s103, %s795
    %v797 = vpack.c.bf16 %v450, %v450
    %v798 = vld [vmem:[#allocation3] sm:$0xff]
    %v799 = vld [vmem:[#allocation3 + $0x8] sm:$0xff]
    %v800 = vld [vmem:[#allocation3 + $0x10] sm:$0xff]
    %v801 = vld [vmem:[#allocation3 + $0x18] sm:$0xff]
    %v802 = vld [vmem:[#allocation3 + $0x20] sm:$0xff]
    %v803 = vld [vmem:[#allocation3 + $0x28] sm:$0xff]
    %v804 = vld [vmem:[#allocation3 + $0x30] sm:$0xff]
    %v805 = vld [vmem:[#allocation3 + $0x38] sm:$0xff]
    %v806 = vld [vmem:[#allocation3 + $0x40] sm:$0xff]
    %v807 = vld [vmem:[#allocation3 + $0x48] sm:$0xff]
    %v808 = vld [vmem:[#allocation3 + $0x50] sm:$0xff]
    %v809 = vld [vmem:[#allocation3 + $0x58] sm:$0xff]
    %v810 = vld [vmem:[#allocation3 + $0x60] sm:$0xff]
    %v811 = vld [vmem:[#allocation3 + $0x68] sm:$0xff]
    %v812 = vld [vmem:[#allocation3 + $0x70] sm:$0xff]
    %v813 = vld [vmem:[#allocation3 + $0x78] sm:$0xff]
    %v814 = vld [vmem:[#allocation3 + $0x80] sm:$0xff]
    %v815 = vld [vmem:[#allocation3 + $0x88] sm:$0xff]
    %v816 = vld [vmem:[#allocation3 + $0x90] sm:$0xff]
    %v817 = vld [vmem:[#allocation3 + $0x98] sm:$0xff]
    %v818 = vld [vmem:[#allocation3 + $0xa0] sm:$0xff]
    %v819 = vld [vmem:[#allocation3 + $0xa8] sm:$0xff]
    %v820 = vld [vmem:[#allocation3 + $0xb0] sm:$0xff]
    %v821 = vld [vmem:[#allocation3 + $0xb8] sm:$0xff]
    %v822 = vld [vmem:[#allocation3 + $0xc0] sm:$0xff]
    %v823 = vld [vmem:[#allocation3 + $0xc8] sm:$0xff]
    %v824 = vld [vmem:[#allocation3 + $0xd0] sm:$0xff]
    %v825 = vld [vmem:[#allocation3 + $0xd8] sm:$0xff]
    %v826 = vld [vmem:[#allocation3 + $0xe0] sm:$0xff]
    %v827 = vld [vmem:[#allocation3 + $0xe8] sm:$0xff]
    %v828 = vld [vmem:[#allocation3 + $0xf0] sm:$0xff]
    %v829 = vld [vmem:[#allocation3 + $0xf8] sm:$0xff]
    %v830 = vld [vmem:[%s4] sm:$0xf]
    %v863 = vunpack.c.l.b16 %v798
    %v864 = vunpack.c.h.b16 %v798
    %v865 = vunpack.c.l.b16 %v799
    %v866 = vunpack.c.h.b16 %v799
    %v867 = vunpack.c.l.b16 %v800
    %v868 = vunpack.c.h.b16 %v800
    %v869 = vunpack.c.l.b16 %v801
    %v870 = vunpack.c.h.b16 %v801
    %v871 = vunpack.c.l.b16 %v802
    %v872 = vunpack.c.h.b16 %v802
    %v873 = vunpack.c.l.b16 %v803
    %v874 = vunpack.c.h.b16 %v803
    %v875 = vunpack.c.l.b16 %v804
    %v876 = vunpack.c.h.b16 %v804
    %v877 = vunpack.c.l.b16 %v805
    %v878 = vunpack.c.h.b16 %v805
    %v879 = vunpack.c.l.b16 %v806
    %v880 = vunpack.c.h.b16 %v806
    %v881 = vunpack.c.l.b16 %v807
    %v882 = vunpack.c.h.b16 %v807
    %v883 = vunpack.c.l.b16 %v808
    %v884 = vunpack.c.h.b16 %v808
    %v885 = vunpack.c.l.b16 %v809
    %v886 = vunpack.c.h.b16 %v809
    %v887 = vunpack.c.l.b16 %v810
    %v888 = vunpack.c.h.b16 %v810
    %v889 = vunpack.c.l.b16 %v811
    %v890 = vunpack.c.h.b16 %v811
    %v891 = vunpack.c.l.b16 %v812
    %v892 = vunpack.c.h.b16 %v812
    %v893 = vunpack.c.l.b16 %v813
    %v894 = vunpack.c.h.b16 %v813
    %v895 = vunpack.c.l.b16 %v814
    %v896 = vunpack.c.h.b16 %v814
    %v897 = vunpack.c.l.b16 %v815
    %v898 = vunpack.c.h.b16 %v815
    %v899 = vunpack.c.l.b16 %v816
    %v900 = vunpack.c.h.b16 %v816
    %v901 = vunpack.c.l.b16 %v817
    %v902 = vunpack.c.h.b16 %v817
    %v903 = vunpack.c.l.b16 %v818
    %v904 = vunpack.c.h.b16 %v818
    %v905 = vunpack.c.l.b16 %v819
    %v906 = vunpack.c.h.b16 %v819
    %v907 = vunpack.c.l.b16 %v820
    %v908 = vunpack.c.h.b16 %v820
    %v909 = vunpack.c.l.b16 %v821
    %v910 = vunpack.c.h.b16 %v821
    %v911 = vunpack.c.l.b16 %v822
    %v912 = vunpack.c.h.b16 %v822
    %v913 = vunpack.c.l.b16 %v823
    %v914 = vunpack.c.h.b16 %v823
    %v915 = vunpack.c.l.b16 %v824
    %v916 = vunpack.c.h.b16 %v824
    %v917 = vunpack.c.l.b16 %v825
    %v918 = vunpack.c.h.b16 %v825
    %v919 = vunpack.c.l.b16 %v826
    %v920 = vunpack.c.h.b16 %v826
    %v921 = vunpack.c.l.b16 %v827
    %v922 = vunpack.c.h.b16 %v827
    %v923 = vunpack.c.l.b16 %v828
    %v924 = vunpack.c.h.b16 %v828
    %v925 = vunpack.c.l.b16 %v829
    %v926 = vunpack.c.h.b16 %v829
    %v927 = vpack.c.b16 %v867, %v863
    %v928 = vpack.c.b16 %v868, %v864
    %v929 = vpack.c.b16 %v869, %v865
    %v930 = vpack.c.b16 %v870, %v866
    %v931 = vpack.c.b16 %v875, %v871
    %v932 = vpack.c.b16 %v876, %v872
    %v933 = vpack.c.b16 %v877, %v873
    %v934 = vpack.c.b16 %v878, %v874
    %v935 = vpack.c.b16 %v883, %v879
    %v936 = vpack.c.b16 %v884, %v880
    %v937 = vpack.c.b16 %v885, %v881
    %v938 = vpack.c.b16 %v886, %v882
    %v939 = vpack.c.b16 %v891, %v887
    %v940 = vpack.c.b16 %v892, %v888
    %v941 = vpack.c.b16 %v893, %v889
    %v942 = vpack.c.b16 %v894, %v890
    %v943 = vpack.c.b16 %v899, %v895
    %v944 = vpack.c.b16 %v900, %v896
    %v945 = vpack.c.b16 %v901, %v897
    %v946 = vpack.c.b16 %v902, %v898
    %v947 = vpack.c.b16 %v907, %v903
    %v948 = vpack.c.b16 %v908, %v904
    %v949 = vpack.c.b16 %v909, %v905
    %v950 = vpack.c.b16 %v910, %v906
    %v951 = vpack.c.b16 %v915, %v911
    %v952 = vpack.c.b16 %v916, %v912
    %v953 = vpack.c.b16 %v917, %v913
    %v954 = vpack.c.b16 %v918, %v914
    %v955 = vpack.c.b16 %v923, %v919
    %v956 = vpack.c.b16 %v924, %v920
    %v957 = vpack.c.b16 %v925, %v921
    %v958 = vpack.c.b16 %v926, %v922
    %v992 = vperm.slane %v830, 0
    %v993 = vperm.slane %v830, 1
    %v994 = vperm.slane %v830, 2
    %v995 = vperm.slane %v830, 3
    %1000 = vmatpush.bf16.msra.mxu0 %v955
    %1001 = vmatpush.bf16.msra.mxu0 %v951
    %1002 = vmatpush.bf16.msra.mxu0 %v947
    %1003 = vmatpush.bf16.msra.mxu0 %v943
    %1004 = vmatpush.bf16.msra.mxu0 %v939
    %1005 = vmatpush.bf16.msra.mxu0 %v935
    %1006 = vmatpush.bf16.msra.mxu0 %v931
    %1007 = vmatpush.bf16.msra.mxu0 %v927
    %1008 = vmatmul.bf16.gmra.mxu0 %v797
    %v1009 = vpop.f32.mrf.mxu0
    %v1010 = vadd.f32 %v992, %v1009
    %v1011 = vpop.f32.mrf.mxu0
    %1012 = vdwg.mxu0
    %1013 = vmatpush.bf16.msra.mxu0 %v956
    %1014 = vmatpush.bf16.msra.mxu0 %v952
    %1015 = vmatpush.bf16.msra.mxu0 %v948
    %1016 = vmatpush.bf16.msra.mxu0 %v944
    %1017 = vmatpush.bf16.msra.mxu0 %v940
    %1018 = vmatpush.bf16.msra.mxu0 %v936
    %1019 = vmatpush.bf16.msra.mxu0 %v932
    %1020 = vmatpush.bf16.msra.mxu0 %v928
    %1021 = vmatmul.bf16.gmra.mxu0 %v797
    %v1022 = vpop.f32.mrf.mxu0
    %v1023 = vadd.f32 %v993, %v1022
    %v1024 = vpop.f32.mrf.mxu0
    %1025 = vdwg.mxu0
    %1026 = vmatpush.bf16.msra.mxu0 %v957
    %1027 = vmatpush.bf16.msra.mxu0 %v953
    %1028 = vmatpush.bf16.msra.mxu0 %v949
    %1029 = vmatpush.bf16.msra.mxu0 %v945
    %1030 = vmatpush.bf16.msra.mxu0 %v941
    %1031 = vmatpush.bf16.msra.mxu0 %v937
    %1032 = vmatpush.bf16.msra.mxu0 %v933
    %1033 = vmatpush.bf16.msra.mxu0 %v929
    %1034 = vmatmul.bf16.gmra.mxu0 %v797
    %v1035 = vpop.f32.mrf.mxu0
    %v1036 = vadd.f32 %v994, %v1035
    %v1037 = vpop.f32.mrf.mxu0
    %1038 = vdwg.mxu0
    %1039 = vmatpush.bf16.msra.mxu0 %v958
    %1040 = vmatpush.bf16.msra.mxu0 %v954
    %1041 = vmatpush.bf16.msra.mxu0 %v950
    %1042 = vmatpush.bf16.msra.mxu0 %v946
    %1043 = vmatpush.bf16.msra.mxu0 %v942
    %1044 = vmatpush.bf16.msra.mxu0 %v938
    %1045 = vmatpush.bf16.msra.mxu0 %v934
    %1046 = vmatpush.bf16.msra.mxu0 %v930
    %1047 = vmatmul.bf16.gmra.mxu0 %v797
    %v1048 = vpop.f32.mrf.mxu0
    %v1049 = vadd.f32 %v995, %v1048
    %v1050 = vpop.f32.mrf.mxu0
    %1051 = vdwg.mxu0
    loop: start=0, step=1, limit=8
    $region67: #{aiav_forward.1} parent=1 // loop_pre_header
      _
    $region68: #{aiav_forward.1} parent=1 // loop_header
      %s1053 = sphi 0, %s1057
      %p1054 = scmp.ge.s32.totalorder %s1053, 8
      %v1058 = vphi 0.0, %v1371
      %v1059 = vphi 0.0, %v1369
    $region69: #{aiav_forward.1} parent=1 // loop_header_branch
      %1056 = sbr.rel (%p1054) target = $region73
    $region70: #{aiav_forward.1} parent=1 // loop_body
      %v1060 = vpack.c.bf16 %v1058, %v1058
      %v1061 = vld [vmem:[#allocation4] sm:$0xff]
      %v1062 = vld [vmem:[#allocation4 + $0x8] sm:$0xff]
      %v1063 = vld [vmem:[#allocation4 + $0x10] sm:$0xff]
      %v1064 = vld [vmem:[#allocation4 + $0x18] sm:$0xff]
      %v1065 = vld [vmem:[#allocation4 + $0x20] sm:$0xff]
      %v1066 = vld [vmem:[#allocation4 + $0x28] sm:$0xff]
      %v1067 = vld [vmem:[#allocation4 + $0x30] sm:$0xff]
      %v1068 = vld [vmem:[#allocation4 + $0x38] sm:$0xff]
      %v1069 = vld [vmem:[#allocation4 + $0x40] sm:$0xff]
      %v1070 = vld [vmem:[#allocation4 + $0x48] sm:$0xff]
      %v1071 = vld [vmem:[#allocation4 + $0x50] sm:$0xff]
      %v1072 = vld [vmem:[#allocation4 + $0x58] sm:$0xff]
      %v1073 = vld [vmem:[#allocation4 + $0x60] sm:$0xff]
      %v1074 = vld [vmem:[#allocation4 + $0x68] sm:$0xff]
      %v1075 = vld [vmem:[#allocation4 + $0x70] sm:$0xff]
      %v1076 = vld [vmem:[#allocation4 + $0x78] sm:$0xff]
      %v1077 = vld [vmem:[#allocation4 + $0x80] sm:$0xff]
      %v1078 = vld [vmem:[#allocation4 + $0x88] sm:$0xff]
      %v1079 = vld [vmem:[#allocation4 + $0x90] sm:$0xff]
      %v1080 = vld [vmem:[#allocation4 + $0x98] sm:$0xff]
      %v1081 = vld [vmem:[#allocation4 + $0xa0] sm:$0xff]
      %v1082 = vld [vmem:[#allocation4 + $0xa8] sm:$0xff]
      %v1083 = vld [vmem:[#allocation4 + $0xb0] sm:$0xff]
      %v1084 = vld [vmem:[#allocation4 + $0xb8] sm:$0xff]
      %v1085 = vld [vmem:[#allocation4 + $0xc0] sm:$0xff]
      %v1086 = vld [vmem:[#allocation4 + $0xc8] sm:$0xff]
      %v1087 = vld [vmem:[#allocation4 + $0xd0] sm:$0xff]
      %v1088 = vld [vmem:[#allocation4 + $0xd8] sm:$0xff]
      %v1089 = vld [vmem:[#allocation4 + $0xe0] sm:$0xff]
      %v1090 = vld [vmem:[#allocation4 + $0xe8] sm:$0xff]
      %v1091 = vld [vmem:[#allocation4 + $0xf0] sm:$0xff]
      %v1092 = vld [vmem:[#allocation4 + $0xf8] sm:$0xff]
      %v1125 = vunpack.c.l.b16 %v1061
      %v1126 = vunpack.c.h.b16 %v1061
      %v1127 = vunpack.c.l.b16 %v1062
      %v1128 = vunpack.c.h.b16 %v1062
      %v1129 = vunpack.c.l.b16 %v1063
      %v1130 = vunpack.c.h.b16 %v1063
      %v1131 = vunpack.c.l.b16 %v1064
      %v1132 = vunpack.c.h.b16 %v1064
      %v1133 = vunpack.c.l.b16 %v1065
      %v1134 = vunpack.c.h.b16 %v1065
      %v1135 = vunpack.c.l.b16 %v1066
      %v1136 = vunpack.c.h.b16 %v1066
      %v1137 = vunpack.c.l.b16 %v1067
      %v1138 = vunpack.c.h.b16 %v1067
      %v1139 = vunpack.c.l.b16 %v1068
      %v1140 = vunpack.c.h.b16 %v1068
      %v1141 = vunpack.c.l.b16 %v1069
      %v1142 = vunpack.c.h.b16 %v1069
      %v1143 = vunpack.c.l.b16 %v1070
      %v1144 = vunpack.c.h.b16 %v1070
      %v1145 = vunpack.c.l.b16 %v1071
      %v1146 = vunpack.c.h.b16 %v1071
      %v1147 = vunpack.c.l.b16 %v1072
      %v1148 = vunpack.c.h.b16 %v1072
      %v1149 = vunpack.c.l.b16 %v1073
      %v1150 = vunpack.c.h.b16 %v1073
      %v1151 = vunpack.c.l.b16 %v1074
      %v1152 = vunpack.c.h.b16 %v1074
      %v1153 = vunpack.c.l.b16 %v1075
      %v1154 = vunpack.c.h.b16 %v1075
      %v1155 = vunpack.c.l.b16 %v1076
      %v1156 = vunpack.c.h.b16 %v1076
      %v1157 = vunpack.c.l.b16 %v1077
      %v1158 = vunpack.c.h.b16 %v1077
      %v1159 = vunpack.c.l.b16 %v1078
      %v1160 = vunpack.c.h.b16 %v1078
      %v1161 = vunpack.c.l.b16 %v1079
      %v1162 = vunpack.c.h.b16 %v1079
      %v1163 = vunpack.c.l.b16 %v1080
      %v1164 = vunpack.c.h.b16 %v1080
      %v1165 = vunpack.c.l.b16 %v1081
      %v1166 = vunpack.c.h.b16 %v1081
      %v1167 = vunpack.c.l.b16 %v1082
      %v1168 = vunpack.c.h.b16 %v1082
      %v1169 = vunpack.c.l.b16 %v1083
      %v1170 = vunpack.c.h.b16 %v1083
      %v1171 = vunpack.c.l.b16 %v1084
      %v1172 = vunpack.c.h.b16 %v1084
      %v1173 = vunpack.c.l.b16 %v1085
      %v1174 = vunpack.c.h.b16 %v1085
      %v1175 = vunpack.c.l.b16 %v1086
      %v1176 = vunpack.c.h.b16 %v1086
      %v1177 = vunpack.c.l.b16 %v1087
      %v1178 = vunpack.c.h.b16 %v1087
      %v1179 = vunpack.c.l.b16 %v1088
      %v1180 = vunpack.c.h.b16 %v1088
      %v1181 = vunpack.c.l.b16 %v1089
      %v1182 = vunpack.c.h.b16 %v1089
      %v1183 = vunpack.c.l.b16 %v1090
      %v1184 = vunpack.c.h.b16 %v1090
      %v1185 = vunpack.c.l.b16 %v1091
      %v1186 = vunpack.c.h.b16 %v1091
      %v1187 = vunpack.c.l.b16 %v1092
      %v1188 = vunpack.c.h.b16 %v1092
      %v1189 = vpack.c.b16 %v1129, %v1125
      %v1190 = vpack.c.b16 %v1130, %v1126
      %v1191 = vpack.c.b16 %v1131, %v1127
      %v1192 = vpack.c.b16 %v1132, %v1128
      %v1193 = vpack.c.b16 %v1137, %v1133
      %v1194 = vpack.c.b16 %v1138, %v1134
      %v1195 = vpack.c.b16 %v1139, %v1135
      %v1196 = vpack.c.b16 %v1140, %v1136
      %v1197 = vpack.c.b16 %v1145, %v1141
      %v1198 = vpack.c.b16 %v1146, %v1142
      %v1199 = vpack.c.b16 %v1147, %v1143
      %v1200 = vpack.c.b16 %v1148, %v1144
      %v1201 = vpack.c.b16 %v1153, %v1149
      %v1202 = vpack.c.b16 %v1154, %v1150
      %v1203 = vpack.c.b16 %v1155, %v1151
      %v1204 = vpack.c.b16 %v1156, %v1152
      %v1205 = vpack.c.b16 %v1161, %v1157
      %v1206 = vpack.c.b16 %v1162, %v1158
      %v1207 = vpack.c.b16 %v1163, %v1159
      %v1208 = vpack.c.b16 %v1164, %v1160
      %v1209 = vpack.c.b16 %v1169, %v1165
      %v1210 = vpack.c.b16 %v1170, %v1166
      %v1211 = vpack.c.b16 %v1171, %v1167
      %v1212 = vpack.c.b16 %v1172, %v1168
      %v1213 = vpack.c.b16 %v1177, %v1173
      %v1214 = vpack.c.b16 %v1178, %v1174
      %v1215 = vpack.c.b16 %v1179, %v1175
      %v1216 = vpack.c.b16 %v1180, %v1176
      %v1217 = vpack.c.b16 %v1185, %v1181
      %v1218 = vpack.c.b16 %v1186, %v1182
      %v1219 = vpack.c.b16 %v1187, %v1183
      %v1220 = vpack.c.b16 %v1188, %v1184
      %1253 = vmatpush.bf16.msra.mxu0 %v1217
      %1254 = vmatpush.bf16.msra.mxu0 %v1213
      %1255 = vmatpush.bf16.msra.mxu0 %v1209
      %1256 = vmatpush.bf16.msra.mxu0 %v1205
      %1257 = vmatpush.bf16.msra.mxu0 %v1201
      %1258 = vmatpush.bf16.msra.mxu0 %v1197
      %1259 = vmatpush.bf16.msra.mxu0 %v1193
      %1260 = vmatpush.bf16.msra.mxu0 %v1189
      %1261 = vmatmul.bf16.gmra.mxu0 %v1060
      %v1262 = vpop.f32.mrf.mxu0
      %v1263 = vadd.f32 0.0, %v1262
      %v1264 = vpop.f32.mrf.mxu0
      %1265 = vdwg.mxu0
      %1266 = vmatpush.bf16.msra.mxu0 %v1218
      %1267 = vmatpush.bf16.msra.mxu0 %v1214
      %1268 = vmatpush.bf16.msra.mxu0 %v1210
      %1269 = vmatpush.bf16.msra.mxu0 %v1206
      %1270 = vmatpush.bf16.msra.mxu0 %v1202
      %1271 = vmatpush.bf16.msra.mxu0 %v1198
      %1272 = vmatpush.bf16.msra.mxu0 %v1194
      %1273 = vmatpush.bf16.msra.mxu0 %v1190
      %1274 = vmatmul.bf16.gmra.mxu0 %v1060
      %v1275 = vpop.f32.mrf.mxu0
      %v1276 = vadd.f32 0.0, %v1275
      %v1277 = vpop.f32.mrf.mxu0
      %1278 = vdwg.mxu0
      %1279 = vmatpush.bf16.msra.mxu0 %v1219
      %1280 = vmatpush.bf16.msra.mxu0 %v1215
      %1281 = vmatpush.bf16.msra.mxu0 %v1211
      %1282 = vmatpush.bf16.msra.mxu0 %v1207
      %1283 = vmatpush.bf16.msra.mxu0 %v1203
      %1284 = vmatpush.bf16.msra.mxu0 %v1199
      %1285 = vmatpush.bf16.msra.mxu0 %v1195
      %1286 = vmatpush.bf16.msra.mxu0 %v1191
      %1287 = vmatmul.bf16.gmra.mxu0 %v1060
      %v1288 = vpop.f32.mrf.mxu0
      %v1289 = vadd.f32 0.0, %v1288
      %v1290 = vpop.f32.mrf.mxu0
      %1291 = vdwg.mxu0
      %1292 = vmatpush.bf16.msra.mxu0 %v1220
      %1293 = vmatpush.bf16.msra.mxu0 %v1216
      %1294 = vmatpush.bf16.msra.mxu0 %v1212
      %1295 = vmatpush.bf16.msra.mxu0 %v1208
      %1296 = vmatpush.bf16.msra.mxu0 %v1204
      %1297 = vmatpush.bf16.msra.mxu0 %v1200
      %1298 = vmatpush.bf16.msra.mxu0 %v1196
      %1299 = vmatpush.bf16.msra.mxu0 %v1192
      %1300 = vmatmul.bf16.gmra.mxu0 %v1060
      %v1301 = vpop.f32.mrf.mxu0
      %v1302 = vadd.f32 0.0, %v1301
      %v1303 = vpop.f32.mrf.mxu0
      %1304 = vdwg.mxu0
      %v1305 = vadd.f32 %v1010, %v1263
      %v1306 = vadd.f32 %v1023, %v1276
      %v1307 = vadd.f32 %v1036, %v1289
      %v1308 = vadd.f32 %v1049, %v1302
      %v1309 = vxor.u32 %v1305, 2147483648
      %v1310 = vmul.f32 %v1309, 1.442695
      %v1311 = vpow.pop %v1310
      %v1312 = vadd.f32 %v1311, 1.0
      %v1313 = vrcp.pop %v1312
      %v1314 = vmul.f32 %v1312, %v1313
      %v1315 = vsub.f32 1.0, %v1314
      %v1316 = vmul.f32 %v1313, %v1315
      %v1317 = vadd.f32 %v1313, %v1316
      %vm1318 = vweird.f32 %v1312
      %vm1319 = vweird.f32 %v1313
      %vm1320 = vmor %vm1318, %vm1319
      %v1321 = vsel %vm1320, %v1313, %v1317
      %v1322 = vand.u32 2147483647, %v1312
      %vm1323 = vcmp.eq.f32.partialorder %v1322, 8.507059e+37
      %v1324 = vand.u32 %v1312, 2147483648
      %v1325 = vor.u32 1.1754944e-38, %v1324
      %v1326 = vsel %vm1323, %v1325, %v1321
      %v1327 = vmul.f32 1.0, %v1326
      %v1328 = vxor.u32 %v1306, 2147483648
      %v1329 = vmul.f32 %v1328, 1.442695
      %v1330 = vpow.pop %v1329
      %v1331 = vadd.f32 %v1330, 1.0
      %v1332 = vrcp.pop %v1331
      %v1333 = vmul.f32 %v1331, %v1332
      %v1334 = vsub.f32 1.0, %v1333
      %v1335 = vmul.f32 %v1332, %v1334
      %v1336 = vadd.f32 %v1332, %v1335
      %vm1337 = vweird.f32 %v1331
      %vm1338 = vweird.f32 %v1332
      %vm1339 = vmor %vm1337, %vm1338
      %v1340 = vsel %vm1339, %v1332, %v1336
      %v1341 = vand.u32 2147483647, %v1331
      %vm1342 = vcmp.eq.f32.partialorder %v1341, 8.507059e+37
      %v1343 = vand.u32 %v1331, 2147483648
      %v1344 = vor.u32 1.1754944e-38, %v1343
      %v1345 = vsel %vm1342, %v1344, %v1340
      %v1346 = vmul.f32 1.0, %v1345
      %v1347 = vtanh.pop %v1307
      %v1348 = vxor.u32 %v1308, 2147483648
      %v1349 = vmul.f32 %v1348, 1.442695
      %v1350 = vpow.pop %v1349
      %v1351 = vadd.f32 %v1350, 1.0
      %v1352 = vrcp.pop %v1351
      %v1353 = vmul.f32 %v1351, %v1352
      %v1354 = vsub.f32 1.0, %v1353
      %v1355 = vmul.f32 %v1352, %v1354
      %v1356 = vadd.f32 %v1352, %v1355
      %vm1357 = vweird.f32 %v1351
      %vm1358 = vweird.f32 %v1352
      %vm1359 = vmor %vm1357, %vm1358
      %v1360 = vsel %vm1359, %v1352, %v1356
      %v1361 = vand.u32 2147483647, %v1351
      %vm1362 = vcmp.eq.f32.partialorder %v1361, 8.507059e+37
      %v1363 = vand.u32 %v1351, 2147483648
      %v1364 = vor.u32 1.1754944e-38, %v1363
      %v1365 = vsel %vm1362, %v1364, %v1360
      %v1366 = vmul.f32 1.0, %v1365
      %v1367 = vmul.f32 %v1346, %v1059
      %v1368 = vmul.f32 %v1327, %v1347
      %v1369 = vadd.f32 %v1367, %v1368
      %v1370 = vtanh.pop %v1369
      %v1371 = vmul.f32 %v1366, %v1370
      %s1372 = scalar_lea.vmem [#allocation6], %s1053
      %1373 = vst [vmem:[%s1372] sm:$0x1] %v1371
    $region71: #{aiav_forward.1} parent=1 // loop_footer
      %s1057 = sadd.s32 1, %s1053
    $region72: #{aiav_forward.1} parent=1 // loop_footer_branch
      %1052 = sbr.rel target = $region68
    $region73: #{aiav_forward.1} parent=1 // loop_exit
      _
    // Predicated region
    $region74: #{aiav_forward.1} parent=1 // pred_check
      _
    $region75: #{aiav_forward.1} parent=1 // pred_check_branch
      %1375 = sbr.rel (0) target = $region77
    $region76: #{aiav_forward.1} parent=1 // pred_region
      %1377 = vsyncadd [#allocation7], 0
      %s1379 = sshll.u32 [#allocation6], 4
      %s1380 = int_to_ptr.vmem [resolvable:$true] %s1379
      %s1381 = sshll.u32 %s7, 4
      %s1382 = int_to_ptr.hbm [resolvable:$true] %s1381
      %1384 = dma.vmem_to_hbm [thread:$0]  %s1380, 128, %s1382, [#allocation7]
    $region77: #{aiav_forward.1} parent=1 // pred_fallthru
      _
    // Predicated region
    $region78: #{aiav_forward.1} parent=1 // pred_check
      _
    $region79: #{aiav_forward.1} parent=1 // pred_check_branch
      %1386 = sbr.rel (0) target = $region81
    $region80: #{aiav_forward.1} parent=1 // pred_region
      %1388 = dma.done [#allocation7], 128
    $region81: #{aiav_forward.1} parent=1 // pred_fallthru
      _
    %1389 = vsyncpa [#allocation7], 1
  %1390 = vsyncmov [#allocation5]
  %s1391 = vpop.sfrf %1390
  %p1392 = scmp.eq.s32.totalorder %s1391, 0
  %p1393 = pneg %p1392
  %1395 = shalt.err (%p1393)
  %s1396 = scalar_lea.sflag [#allocation5], 1
  %1397 = vsyncmov %s1396
  %s1398 = vpop.sfrf %1397
  %p1399 = scmp.eq.s32.totalorder %s1398, 0
  %p1400 = pneg %p1399
  %1402 = shalt.err (%p1400)

</llo_original>
